<compile_context>
chip_gen: v7x
topology: tpu7x:2x2x1
jax: 0.10.0
libtpu: 0.0.40
codegen_flags: <defaults>
</compile_context>

<pallas_src>
import functools

import jax
import jax.numpy as jnp
from jax.experimental import pallas as pl
from jax.experimental.pallas import tpu as pltpu


def _round_up(x, m):
    return ((x + m - 1) // m) * m


# ----------------------------------------------------------------------------
# Fused kernel: o = (normalize_rows(x) @ W_t) * (1/temp)
# ----------------------------------------------------------------------------
def _predictor_kernel(x_ref, w_ref, o_ref, *, inv_temp, eps):
    # x_ref: (tm, Kp) f32     — one tile of rows, full (padded) feature dim
    # w_ref: (Kp, Np) bf16    — pre-transposed / pre-padded / pre-cast weight
    # o_ref: (tm, Np) f32     — lane-dense (Np is a multiple of 128)
    x = x_ref[...]
    ssq = jnp.sum(x * x, axis=-1, keepdims=True)            # (tm, 1)
    # 1 / max(||x||, eps)  ==  rsqrt(max(||x||^2, eps^2))   (EUP, no div/sqrt)
    inv_norm = jax.lax.rsqrt(jnp.maximum(ssq, eps * eps))
    xn = x * inv_norm                                        # F.normalize(p=2, dim=1)
    # bf16 operands on the MXU, f32 accumulation.
    out = jnp.dot(xn.astype(jnp.bfloat16), w_ref[...],
                  preferred_element_type=jnp.float32)
    o_ref[...] = out * inv_temp


# ----------------------------------------------------------------------------
# One-time weight preparation (hoisted out of the forward pass)
# ----------------------------------------------------------------------------
def prepare_weight(w):
    """w: (num_class, inc) f32 PyTorch fc.weight -> (Kp, Np) bf16, K-major."""
    num_class, inc = w.shape
    kp = _round_up(inc, 128)
    np_ = _round_up(num_class, 128)
    w_t = jnp.zeros((kp, np_), jnp.float32).at[:inc, :num_class].set(w.T)
    return w_t.astype(jnp.bfloat16)


# ----------------------------------------------------------------------------
# Forward wrapper
# ----------------------------------------------------------------------------
def predictor_forward(w_t, x, *, num_class, temp=0.05, eps=1e-12,
                      reverse=False, eta=0.1):
    """Pallas Predictor.forward.  x: (B, inc) f32, w_t: prepared weight."""
    # TODO(synk): grad_reverse(x, eta) only scales gradients in backward; the
    # forward value is identity, so `reverse`/`eta` are accepted but no-ops here.
    del reverse, eta

    m, k = x.shape
    kp, np_ = w_t.shape
    assert k <= kp, "feature dim larger than prepared weight"

    x_p = x.astype(jnp.float32)

    if m <= 256:
        # Single M tile equal to the full first dim -> no row padding needed
        # (block_shape dims equal to the array extent satisfy the (8,128) rule).
        tm, mp = m, m
    else:
        tm = 256
        mp = _round_up(m, tm)

    if (mp, kp) != (m, k):
        # Zero rows normalize to zero (eps clamp), zero K-padding adds nothing.
        x_p = jnp.zeros((mp, kp), jnp.float32).at[:m, :k].set(x_p)

    grid = (mp // tm,)
    cost = pl.CostEstimate(
        flops=2 * mp * kp * np_ + 3 * mp * kp,
        transcendentals=mp,
        bytes_accessed=mp * kp * 4 + kp * np_ * 2 + mp * np_ * 4,
    )

    out = pl.pallas_call(
        functools.partial(_predictor_kernel, inv_temp=1.0 / temp, eps=eps),
        out_shape=jax.ShapeDtypeStruct((mp, np_), jnp.float32),
        grid_spec=pltpu.PrefetchScalarGridSpec(
            num_scalar_prefetch=0,
            grid=grid,
            in_specs=[
                pl.BlockSpec((tm, kp), lambda i: (i, 0)),   # activations: stream M
                pl.BlockSpec((kp, np_), lambda i: (0, 0)),  # weight: VMEM-resident
            ],
            out_specs=pl.BlockSpec((tm, np_), lambda i: (i, 0)),
        ),
        compiler_params=pltpu.CompilerParams(
            dimension_semantics=("parallel",),
        ),
        cost_estimate=cost,
    )(x_p, w_t)

    if (mp, np_) != (m, num_class):
        out = out[:m, :num_class]
    return out


# ----------------------------------------------------------------------------
# Demo / self-test
# ----------------------------------------------------------------------------
if __name__ == "__main__":
    key = jax.random.PRNGKey(0)
    wkey, xkey = jax.random.split(key)

    num_class, inc, temp = 64, 4096, 0.05
    batch = 2

    # Synthetic deterministic parameters (PyTorch layout: fc.weight (num_class, inc)).
    fc_weight = 0.01 * jax.random.normal(wkey, (num_class, inc), jnp.float32)
    w_t = prepare_weight(fc_weight)                    # done once, reused every call

    x = jax.random.normal(xkey, (batch, inc), jnp.float32)

    fwd = jax.jit(functools.partial(predictor_forward, num_class=num_class, temp=temp))
    out = fwd(w_t, x)
    jax.block_until_ready(out)

    assert out.shape == (batch, num_class) and out.dtype == jnp.float32

    # Reference (plain JAX, f32) — tolerance covers the bf16 operand cast.
    xn = x / jnp.maximum(jnp.linalg.norm(x, axis=1, keepdims=True), 1e-12)
    ref = (xn @ fc_weight.T) / temp
    assert jnp.allclose(out, ref, atol=2e-2, rtol=2e-2), \
        f"max err {jnp.max(jnp.abs(out - ref))}"

    print("KERNEL_OK")
</pallas_src>

<mosaic_0001>
module attributes {stable_mosaic.version = 11 : i64} {
  func.func @_predictor_kernel(%arg0: i32, %arg1: memref<2x4096xf32, #tpu.memory_space<vmem>>, %arg2: memref<4096x128xbf16, #tpu.memory_space<vmem>>, %arg3: memref<2x128xf32, #tpu.memory_space<vmem>>) attributes {dimension_semantics = [#tpu.dimension_semantics<parallel>], iteration_bounds = array<i64: 1>, scalar_prefetch = 0 : i64, scratch_operands = 0 : i64, tpu.core_type = #tpu.core_type<tc>, window_params = [{transform_indices = @transform_0, window_bounds = array<i64: 2, 4096>}, {pipeline_mode = #tpu.pipeline_mode<synchronous>, transform_indices = @transform_1, window_bounds = array<i64: 4096, 128>}, {transform_indices = @transform_2, window_bounds = array<i64: 2, 128>}]} {
    %c0 = arith.constant 0 : index
    %c0_0 = arith.constant 0 : index
    %0 = vector.load %arg1[%c0, %c0_0] : memref<2x4096xf32, #tpu.memory_space<vmem>>, vector<2x4096xf32>
    %1 = arith.mulf %0, %0 : vector<2x4096xf32>
    %cst = arith.constant dense<0.000000e+00> : vector<2xf32>
    %2 = vector.multi_reduction <add>, %1, %cst [1] : vector<2x4096xf32> to vector<2xf32>
    %3 = vector.shape_cast %2 : vector<2xf32> to vector<2x1xf32>
    %cst_1 = arith.constant 1.000000e-24 : f32
    %4 = vector.broadcast %cst_1 : f32 to vector<2x1xf32>
    %5 = arith.maximumf %3, %4 : vector<2x1xf32>
    %6 = math.rsqrt %5 : vector<2x1xf32>
    %7 = vector.broadcast %6 : vector<2x1xf32> to vector<2x4096xf32>
    %8 = arith.mulf %0, %7 : vector<2x4096xf32>
    %9 = arith.truncf %8 : vector<2x4096xf32> to vector<2x4096xbf16>
    %c0_2 = arith.constant 0 : index
    %c0_3 = arith.constant 0 : index
    %10 = vector.load %arg2[%c0_2, %c0_3] : memref<4096x128xbf16, #tpu.memory_space<vmem>>, vector<4096x128xbf16>
    %cst_4 = arith.constant dense<0.000000e+00> : vector<2x128xf32>
    %11 = tpu.matmul %9, %10, %cst_4 {dimension_numbers = #tpu.dot_dimension_numbers<[1], [0], [0], [1], [0, 0, 1, 1], [], []>} : vector<2x4096xbf16>, vector<4096x128xbf16>, vector<2x128xf32> -> vector<2x128xf32>
    %cst_5 = arith.constant 2.000000e+01 : f32
    %12 = vector.broadcast %cst_5 : f32 to vector<2x128xf32>
    %13 = arith.mulf %11, %12 : vector<2x128xf32>
    %c0_6 = arith.constant 0 : index
    %c0_7 = arith.constant 0 : index
    %14 = vector.load %arg3[%c0_6, %c0_7] : memref<2x128xf32, #tpu.memory_space<vmem>>, vector<2x128xf32>
    tpu.vector_store %arg3[%c0_6, %c0_7], %13 {strides = array<i32>} : memref<2x128xf32, #tpu.memory_space<vmem>>, vector<2x128xf32>,
    return
  }
  func.func @transform_0(%arg0: i32) -> (i32, i32) {
    %c0_i32 = arith.constant 0 : i32
    %c0_i32_0 = arith.constant 0 : i32
    return %arg0, %c0_i32 : i32, i32
  }
  func.func @transform_1(%arg0: i32) -> (i32, i32) {
    %c0_i32 = arith.constant 0 : i32
    %c0_i32_0 = arith.constant 0 : i32
    %c0_i32_1 = arith.constant 0 : i32
    return %c0_i32, %c0_i32_0 : i32, i32
  }
  func.func @transform_2(%arg0: i32) -> (i32, i32) {
    %c0_i32 = arith.constant 0 : i32
    %c0_i32_0 = arith.constant 0 : i32
    return %arg0, %c0_i32 : i32, i32
  }
}

</mosaic_0001>

<llo_original>
// kernel: predictor_forward.1
$region0: #{predictor_forward.1}
  #allocation0 [shape = 'u32[]', space=smem, size = 0x4, offset = 0x4, fixed_abs, tag = 'smem constant byte address 0x4 - core index']
  #allocation1 [shape = 'u32[144,128]{1,0:T(1,128)}', space=vmem, size = 0x12000, scoped, tag = 'internal scratch']
  %s0 = inlined_call_operand.hbm [shape: f32[2,4096], index: 0, kind: input, shape index: {}]
  %s1 = inlined_call_operand.hbm [shape: bf16[4096,128], index: 1, kind: input, shape index: {}]
  %s2 = inlined_call_operand.hbm [shape: f32[2,128], index: 2, kind: output, shape index: {}]
  %s3 = sld [smem:[#allocation0]]
  $region26: #{predictor_forward.1} parent=0
    _
  %s5 = ssub.s32 1, %s3
  %s6 = scalar_select 0, %s5, %s3
  $region1: #{predictor_forward.1} parent=0
    #allocation2 [shape = 'u8[32768]{0}', space=vmem, size = 0x8000, scoped, tag = 'input window, operand 0, single buffered']
    #allocation3 [shape = 's32[1]{0}', space=sflag, size = 0x4, scoped, tag = 'scoped memory for predictor_forward.1']
    #allocation4 [shape = 's32[1]{0}', space=sflag, size = 0x4, scoped, tag = 'scoped memory for predictor_forward.1']
    #allocation5 [shape = 'u8[1048576]{0}', space=vmem, size = 0x100000, scoped, tag = 'input window, operand 1, single buffered']
    #allocation6 [shape = 's32[1]{0}', space=sflag, size = 0x4, scoped, tag = 'scoped memory for predictor_forward.1']
    #allocation7 [shape = 'u8[1024]{0}', space=vmem, size = 0x400, scoped, tag = 'output window, operand 0, single buffered']
    %7 = vsyncpa [#allocation3], 0
    %8 = vsyncpa [#allocation6], 0
    %9 = vsyncpa [#allocation4], 0
    // Predicated region
    $region2: #{predictor_forward.1} parent=1 // pred_check
      _
    $region3: #{predictor_forward.1} parent=1 // pred_check_branch
      %11 = sbr.rel (0) target = $region5
    $region4: #{predictor_forward.1} parent=1 // pred_region
      %s13 = ssub.s32 1024, 1024
      %14 = vsyncadd [#allocation3], %s13
      %s16 = sshll.u32 [#allocation2], 4
      %s17 = int_to_ptr.vmem [resolvable:$true] %s16
      %19 = dma.hbm_to_vmem [thread:$0]  %s0, 1024, %s17, [#allocation3]
    $region5: #{predictor_forward.1} parent=1 // pred_fallthru
      _
    // Predicated region
    $region6: #{predictor_forward.1} parent=1 // pred_check
      _
    $region7: #{predictor_forward.1} parent=1 // pred_check_branch
      %21 = sbr.rel (0) target = $region9
    $region8: #{predictor_forward.1} parent=1 // pred_region
      %s23 = ssub.s32 32768, 32768
      %24 = vsyncadd [#allocation6], %s23
      %s25 = sshll.u32 [#allocation5], 4
      %s26 = int_to_ptr.vmem [resolvable:$true] %s25
      %31 = dma.hbm_to_vmem [thread:$0]  %s1, 32768, %s26, [#allocation6], 64, 64, 4
    $region9: #{predictor_forward.1} parent=1 // pred_fallthru
      _
    // Predicated region
    $region10: #{predictor_forward.1} parent=1 // pred_check
      _
    $region11: #{predictor_forward.1} parent=1 // pred_check_branch
      %33 = sbr.rel (0) target = $region13
    $region12: #{predictor_forward.1} parent=1 // pred_region
      %34 = dma.done [#allocation3], 1024
    $region13: #{predictor_forward.1} parent=1 // pred_fallthru
      _
    // Predicated region
    $region14: #{predictor_forward.1} parent=1 // pred_check
      _
    $region15: #{predictor_forward.1} parent=1 // pred_check_branch
      %36 = sbr.rel (0) target = $region17
    $region16: #{predictor_forward.1} parent=1 // pred_region
      %37 = dma.done [#allocation6], 32768
    $region17: #{predictor_forward.1} parent=1 // pred_fallthru
      _
    %v39 = vld [vmem:[#allocation2] sm:$0xff]
    %v40 = vld [vmem:[#allocation2 + $0x8] sm:$0xff]
    %v41 = vld [vmem:[#allocation2 + $0x10] sm:$0xff]
    %v42 = vld [vmem:[#allocation2 + $0x18] sm:$0xff]
    %v43 = vld [vmem:[#allocation2 + $0x20] sm:$0xff]
    %v44 = vld [vmem:[#allocation2 + $0x28] sm:$0xff]
    %v45 = vld [vmem:[#allocation2 + $0x30] sm:$0xff]
    %v46 = vld [vmem:[#allocation2 + $0x38] sm:$0xff]
    %v47 = vmul.f32 %v39, %v39
    %v48 = vmul.f32 %v40, %v40
    %v49 = vmul.f32 %v41, %v41
    %v50 = vmul.f32 %v42, %v42
    %v51 = vmul.f32 %v43, %v43
    %v52 = vmul.f32 %v44, %v44
    %v53 = vmul.f32 %v45, %v45
    %v54 = vmul.f32 %v46, %v46
    %v63 = vcombine.high %v47, %v47
    %v65 = vunpack.c.l.s4 1983009808
    %v66 = vunpack.c.0.s8 %v65
    %v67 = vlaneseq
    %v68 = vshrl.u32 %v67, 7
    %v69 = vsub.s32 %v66, %v68
    %v70 = vrot.slane %v47, %v69
    %v72 = vunpack.c.l.s4 1983009808
    %v73 = vunpack.c.0.s8 %v72
    %v74 = vlaneseq
    %v75 = vshrl.u32 %v74, 7
    %v76 = vsub.s32 %v73, %v75
    %v77 = vrot.slane %v63, %v76
    %v78 = vcombine.high %v70, %v70
    %v79 = vcombine.high %v77, %v77
    %v80 = vcombine.high %v48, %v48
    %v82 = vunpack.c.l.s4 1983009808
    %v83 = vunpack.c.0.s8 %v82
    %v84 = vlaneseq
    %v85 = vshrl.u32 %v84, 7
    %v86 = vsub.s32 %v83, %v85
    %v87 = vrot.slane %v48, %v86
    %v89 = vunpack.c.l.s4 1983009808
    %v90 = vunpack.c.0.s8 %v89
    %v91 = vlaneseq
    %v92 = vshrl.u32 %v91, 7
    %v93 = vsub.s32 %v90, %v92
    %v94 = vrot.slane %v80, %v93
    %v95 = vcombine.high %v87, %v87
    %v96 = vcombine.high %v94, %v94
    %v97 = vcombine.high %v49, %v49
    %v99 = vunpack.c.l.s4 1983009808
    %v100 = vunpack.c.0.s8 %v99
    %v101 = vlaneseq
    %v102 = vshrl.u32 %v101, 7
    %v103 = vsub.s32 %v100, %v102
    %v104 = vrot.slane %v49, %v103
    %v106 = vunpack.c.l.s4 1983009808
    %v107 = vunpack.c.0.s8 %v106
    %v108 = vlaneseq
    %v109 = vshrl.u32 %v108, 7
    %v110 = vsub.s32 %v107, %v109
    %v111 = vrot.slane %v97, %v110
    %v112 = vcombine.high %v104, %v104
    %v113 = vcombine.high %v111, %v111
    %v114 = vcombine.high %v50, %v50
    %v116 = vunpack.c.l.s4 1983009808
    %v117 = vunpack.c.0.s8 %v116
    %v118 = vlaneseq
    %v119 = vshrl.u32 %v118, 7
    %v120 = vsub.s32 %v117, %v119
    %v121 = vrot.slane %v50, %v120
    %v123 = vunpack.c.l.s4 1983009808
    %v124 = vunpack.c.0.s8 %v123
    %v125 = vlaneseq
    %v126 = vshrl.u32 %v125, 7
    %v127 = vsub.s32 %v124, %v126
    %v128 = vrot.slane %v114, %v127
    %v129 = vcombine.high %v121, %v121
    %v130 = vcombine.high %v128, %v128
    %v131 = vcombine.high %v51, %v51
    %v133 = vunpack.c.l.s4 1983009808
    %v134 = vunpack.c.0.s8 %v133
    %v135 = vlaneseq
    %v136 = vshrl.u32 %v135, 7
    %v137 = vsub.s32 %v134, %v136
    %v138 = vrot.slane %v51, %v137
    %v140 = vunpack.c.l.s4 1983009808
    %v141 = vunpack.c.0.s8 %v140
    %v142 = vlaneseq
    %v143 = vshrl.u32 %v142, 7
    %v144 = vsub.s32 %v141, %v143
    %v145 = vrot.slane %v131, %v144
    %v146 = vcombine.high %v138, %v138
    %v147 = vcombine.high %v145, %v145
    %v148 = vcombine.high %v52, %v52
    %v150 = vunpack.c.l.s4 1983009808
    %v151 = vunpack.c.0.s8 %v150
    %v152 = vlaneseq
    %v153 = vshrl.u32 %v152, 7
    %v154 = vsub.s32 %v151, %v153
    %v155 = vrot.slane %v52, %v154
    %v157 = vunpack.c.l.s4 1983009808
    %v158 = vunpack.c.0.s8 %v157
    %v159 = vlaneseq
    %v160 = vshrl.u32 %v159, 7
    %v161 = vsub.s32 %v158, %v160
    %v162 = vrot.slane %v148, %v161
    %v163 = vcombine.high %v155, %v155
    %v164 = vcombine.high %v162, %v162
    %v165 = vcombine.high %v53, %v53
    %v167 = vunpack.c.l.s4 1983009808
    %v168 = vunpack.c.0.s8 %v167
    %v169 = vlaneseq
    %v170 = vshrl.u32 %v169, 7
    %v171 = vsub.s32 %v168, %v170
    %v172 = vrot.slane %v53, %v171
    %v174 = vunpack.c.l.s4 1983009808
    %v175 = vunpack.c.0.s8 %v174
    %v176 = vlaneseq
    %v177 = vshrl.u32 %v176, 7
    %v178 = vsub.s32 %v175, %v177
    %v179 = vrot.slane %v165, %v178
    %v180 = vcombine.high %v172, %v172
    %v181 = vcombine.high %v179, %v179
    %v182 = vcombine.high %v54, %v54
    %v184 = vunpack.c.l.s4 1983009808
    %v185 = vunpack.c.0.s8 %v184
    %v186 = vlaneseq
    %v187 = vshrl.u32 %v186, 7
    %v188 = vsub.s32 %v185, %v187
    %v189 = vrot.slane %v54, %v188
    %v191 = vunpack.c.l.s4 1983009808
    %v192 = vunpack.c.0.s8 %v191
    %v193 = vlaneseq
    %v194 = vshrl.u32 %v193, 7
    %v195 = vsub.s32 %v192, %v194
    %v196 = vrot.slane %v182, %v195
    %v197 = vcombine.high %v189, %v189
    %v198 = vcombine.high %v196, %v196
    %vm231 = vcmask 1041408
    %v232 = vsel %vm231, %v70, 0.0
    %v233 = vsel %vm231, %v78, 0.0
    %v234 = vadd.f32 %v232, %v233
    %v235 = vsel %vm231, %v77, 0.0
    %v236 = vadd.f32 %v234, %v235
    %v237 = vsel %vm231, %v79, 0.0
    %v238 = vadd.f32 %v236, %v237
    %v239 = vsel %vm231, %v87, 0.0
    %v240 = vadd.f32 %v238, %v239
    %v241 = vsel %vm231, %v95, 0.0
    %v242 = vadd.f32 %v240, %v241
    %v243 = vsel %vm231, %v94, 0.0
    %v244 = vadd.f32 %v242, %v243
    %v245 = vsel %vm231, %v96, 0.0
    %v246 = vadd.f32 %v244, %v245
    %v247 = vsel %vm231, %v104, 0.0
    %v248 = vadd.f32 %v246, %v247
    %v249 = vsel %vm231, %v112, 0.0
    %v250 = vadd.f32 %v248, %v249
    %v251 = vsel %vm231, %v111, 0.0
    %v252 = vadd.f32 %v250, %v251
    %v253 = vsel %vm231, %v113, 0.0
    %v254 = vadd.f32 %v252, %v253
    %v255 = vsel %vm231, %v121, 0.0
    %v256 = vadd.f32 %v254, %v255
    %v257 = vsel %vm231, %v129, 0.0
    %v258 = vadd.f32 %v256, %v257
    %v259 = vsel %vm231, %v128, 0.0
    %v260 = vadd.f32 %v258, %v259
    %v261 = vsel %vm231, %v130, 0.0
    %v262 = vadd.f32 %v260, %v261
    %v263 = vsel %vm231, %v138, 0.0
    %v264 = vadd.f32 %v262, %v263
    %v265 = vsel %vm231, %v146, 0.0
    %v266 = vadd.f32 %v264, %v265
    %v267 = vsel %vm231, %v145, 0.0
    %v268 = vadd.f32 %v266, %v267
    %v269 = vsel %vm231, %v147, 0.0
    %v270 = vadd.f32 %v268, %v269
    %v271 = vsel %vm231, %v155, 0.0
    %v272 = vadd.f32 %v270, %v271
    %v273 = vsel %vm231, %v163, 0.0
    %v274 = vadd.f32 %v272, %v273
    %v275 = vsel %vm231, %v162, 0.0
    %v276 = vadd.f32 %v274, %v275
    %v277 = vsel %vm231, %v164, 0.0
    %v278 = vadd.f32 %v276, %v277
    %v279 = vsel %vm231, %v172, 0.0
    %v280 = vadd.f32 %v278, %v279
    %v281 = vsel %vm231, %v180, 0.0
    %v282 = vadd.f32 %v280, %v281
    %v283 = vsel %vm231, %v179, 0.0
    %v284 = vadd.f32 %v282, %v283
    %v285 = vsel %vm231, %v181, 0.0
    %v286 = vadd.f32 %v284, %v285
    %v287 = vsel %vm231, %v189, 0.0
    %v288 = vadd.f32 %v286, %v287
    %v289 = vsel %vm231, %v197, 0.0
    %v290 = vadd.f32 %v288, %v289
    %v291 = vsel %vm231, %v196, 0.0
    %v292 = vadd.f32 %v290, %v291
    %v293 = vsel %vm231, %v198, 0.0
    %v294 = vadd.f32 %v292, %v293
    %295 = vadd.xlane.f32.xlu0 %v294
    %v296 = vpop.xlane.xlu0 %295
    %v297 = vmax.f32 %v296, 1e-24
    %v298 = vrsqrt.pop %v297
    %v301 = vunpack.c.l.s4 269488144
    %v302 = vunpack.c.0.s8 %v301
    %v303 = vlaneseq
    %v304 = vshrl.u32 %v303, 7
    %v305 = vsub.s32 %v302, %v304
    %v306 = vrot.slane %v298, %v305
    %v308 = vmul.f32 %v39, %v306
    %v309 = vmul.f32 %v40, %v306
    %v310 = vmul.f32 %v41, %v306
    %v311 = vmul.f32 %v42, %v306
    %v312 = vmul.f32 %v43, %v306
    %v313 = vmul.f32 %v44, %v306
    %v314 = vmul.f32 %v45, %v306
    %v315 = vmul.f32 %v46, %v306
    %v324 = vcombine.high %v308, %v308
    %v326 = vunpack.c.l.s4 1983009808
    %v327 = vunpack.c.0.s8 %v326
    %v328 = vlaneseq
    %v329 = vshrl.u32 %v328, 7
    %v330 = vsub.s32 %v327, %v329
    %v331 = vrot.slane %v308, %v330
    %v333 = vunpack.c.l.s4 1983009808
    %v334 = vunpack.c.0.s8 %v333
    %v335 = vlaneseq
    %v336 = vshrl.u32 %v335, 7
    %v337 = vsub.s32 %v334, %v336
    %v338 = vrot.slane %v324, %v337
    %v339 = vcombine.high %v331, %v331
    %v340 = vcombine.high %v338, %v338
    %v341 = vcombine.high %v309, %v309
    %v343 = vunpack.c.l.s4 1983009808
    %v344 = vunpack.c.0.s8 %v343
    %v345 = vlaneseq
    %v346 = vshrl.u32 %v345, 7
    %v347 = vsub.s32 %v344, %v346
    %v348 = vrot.slane %v309, %v347
    %v350 = vunpack.c.l.s4 1983009808
    %v351 = vunpack.c.0.s8 %v350
    %v352 = vlaneseq
    %v353 = vshrl.u32 %v352, 7
    %v354 = vsub.s32 %v351, %v353
    %v355 = vrot.slane %v341, %v354
    %v356 = vcombine.high %v348, %v348
    %v357 = vcombine.high %v355, %v355
    %v358 = vcombine.high %v310, %v310
    %v360 = vunpack.c.l.s4 1983009808
    %v361 = vunpack.c.0.s8 %v360
    %v362 = vlaneseq
    %v363 = vshrl.u32 %v362, 7
    %v364 = vsub.s32 %v361, %v363
    %v365 = vrot.slane %v310, %v364
    %v367 = vunpack.c.l.s4 1983009808
    %v368 = vunpack.c.0.s8 %v367
    %v369 = vlaneseq
    %v370 = vshrl.u32 %v369, 7
    %v371 = vsub.s32 %v368, %v370
    %v372 = vrot.slane %v358, %v371
    %v373 = vcombine.high %v365, %v365
    %v374 = vcombine.high %v372, %v372
    %v375 = vcombine.high %v311, %v311
    %v377 = vunpack.c.l.s4 1983009808
    %v378 = vunpack.c.0.s8 %v377
    %v379 = vlaneseq
    %v380 = vshrl.u32 %v379, 7
    %v381 = vsub.s32 %v378, %v380
    %v382 = vrot.slane %v311, %v381
    %v384 = vunpack.c.l.s4 1983009808
    %v385 = vunpack.c.0.s8 %v384
    %v386 = vlaneseq
    %v387 = vshrl.u32 %v386, 7
    %v388 = vsub.s32 %v385, %v387
    %v389 = vrot.slane %v375, %v388
    %v390 = vcombine.high %v382, %v382
    %v391 = vcombine.high %v389, %v389
    %v392 = vcombine.high %v312, %v312
    %v394 = vunpack.c.l.s4 1983009808
    %v395 = vunpack.c.0.s8 %v394
    %v396 = vlaneseq
    %v397 = vshrl.u32 %v396, 7
    %v398 = vsub.s32 %v395, %v397
    %v399 = vrot.slane %v312, %v398
    %v401 = vunpack.c.l.s4 1983009808
    %v402 = vunpack.c.0.s8 %v401
    %v403 = vlaneseq
    %v404 = vshrl.u32 %v403, 7
    %v405 = vsub.s32 %v402, %v404
    %v406 = vrot.slane %v392, %v405
    %v407 = vcombine.high %v399, %v399
    %v408 = vcombine.high %v406, %v406
    %v409 = vcombine.high %v313, %v313
    %v411 = vunpack.c.l.s4 1983009808
    %v412 = vunpack.c.0.s8 %v411
    %v413 = vlaneseq
    %v414 = vshrl.u32 %v413, 7
    %v415 = vsub.s32 %v412, %v414
    %v416 = vrot.slane %v313, %v415
    %v418 = vunpack.c.l.s4 1983009808
    %v419 = vunpack.c.0.s8 %v418
    %v420 = vlaneseq
    %v421 = vshrl.u32 %v420, 7
    %v422 = vsub.s32 %v419, %v421
    %v423 = vrot.slane %v409, %v422
    %v424 = vcombine.high %v416, %v416
    %v425 = vcombine.high %v423, %v423
    %v426 = vcombine.high %v314, %v314
    %v428 = vunpack.c.l.s4 1983009808
    %v429 = vunpack.c.0.s8 %v428
    %v430 = vlaneseq
    %v431 = vshrl.u32 %v430, 7
    %v432 = vsub.s32 %v429, %v431
    %v433 = vrot.slane %v314, %v432
    %v435 = vunpack.c.l.s4 1983009808
    %v436 = vunpack.c.0.s8 %v435
    %v437 = vlaneseq
    %v438 = vshrl.u32 %v437, 7
    %v439 = vsub.s32 %v436, %v438
    %v440 = vrot.slane %v426, %v439
    %v441 = vcombine.high %v433, %v433
    %v442 = vcombine.high %v440, %v440
    %v443 = vcombine.high %v315, %v315
    %v445 = vunpack.c.l.s4 1983009808
    %v446 = vunpack.c.0.s8 %v445
    %v447 = vlaneseq
    %v448 = vshrl.u32 %v447, 7
    %v449 = vsub.s32 %v446, %v448
    %v450 = vrot.slane %v315, %v449
    %v452 = vunpack.c.l.s4 1983009808
    %v453 = vunpack.c.0.s8 %v452
    %v454 = vlaneseq
    %v455 = vshrl.u32 %v454, 7
    %v456 = vsub.s32 %v453, %v455
    %v457 = vrot.slane %v443, %v456
    %v458 = vcombine.high %v450, %v450
    %v459 = vcombine.high %v457, %v457
    %v492 = vpack.c.bf16 %v331, %v331
    %v493 = vpack.c.bf16 %v339, %v339
    %v494 = vpack.c.bf16 %v338, %v338
    %v495 = vpack.c.bf16 %v340, %v340
    %v496 = vpack.c.bf16 %v348, %v348
    %v497 = vpack.c.bf16 %v356, %v356
    %v498 = vpack.c.bf16 %v355, %v355
    %v499 = vpack.c.bf16 %v357, %v357
    %v500 = vpack.c.bf16 %v365, %v365
    %v501 = vpack.c.bf16 %v373, %v373
    %v502 = vpack.c.bf16 %v372, %v372
    %v503 = vpack.c.bf16 %v374, %v374
    %v504 = vpack.c.bf16 %v382, %v382
    %v505 = vpack.c.bf16 %v390, %v390
    %v506 = vpack.c.bf16 %v389, %v389
    %v507 = vpack.c.bf16 %v391, %v391
    %v508 = vpack.c.bf16 %v399, %v399
    %v509 = vpack.c.bf16 %v407, %v407
    %v510 = vpack.c.bf16 %v406, %v406
    %v511 = vpack.c.bf16 %v408, %v408
    %v512 = vpack.c.bf16 %v416, %v416
    %v513 = vpack.c.bf16 %v424, %v424
    %v514 = vpack.c.bf16 %v423, %v423
    %v515 = vpack.c.bf16 %v425, %v425
    %v516 = vpack.c.bf16 %v433, %v433
    %v517 = vpack.c.bf16 %v441, %v441
    %v518 = vpack.c.bf16 %v440, %v440
    %v519 = vpack.c.bf16 %v442, %v442
    %v520 = vpack.c.bf16 %v450, %v450
    %v521 = vpack.c.bf16 %v458, %v458
    %v522 = vpack.c.bf16 %v457, %v457
    %v523 = vpack.c.bf16 %v459, %v459
    %v524 = vld [vmem:[#allocation5] sm:$0xf]
    %v525 = vld [vmem:[#allocation5 + $0x4] sm:$0xf]
    %v526 = vld [vmem:[#allocation5 + $0x8] sm:$0xf]
    %v527 = vld [vmem:[#allocation5 + $0xc] sm:$0xf]
    %v528 = vld [vmem:[#allocation5 + $0x10] sm:$0xf]
    %v529 = vld [vmem:[#allocation5 + $0x14] sm:$0xf]
    %v530 = vld [vmem:[#allocation5 + $0x18] sm:$0xf]
    %v531 = vld [vmem:[#allocation5 + $0x1c] sm:$0xf]
    %v532 = vld [vmem:[#allocation5 + $0x20] sm:$0xf]
    %v533 = vld [vmem:[#allocation5 + $0x24] sm:$0xf]
    %v534 = vld [vmem:[#allocation5 + $0x28] sm:$0xf]
    %v535 = vld [vmem:[#allocation5 + $0x2c] sm:$0xf]
    %v536 = vld [vmem:[#allocation5 + $0x30] sm:$0xf]
    %v537 = vld [vmem:[#allocation5 + $0x34] sm:$0xf]
    %v538 = vld [vmem:[#allocation5 + $0x38] sm:$0xf]
    %v539 = vld [vmem:[#allocation5 + $0x3c] sm:$0xf]
    %v540 = vld [vmem:[#allocation5 + $0x40] sm:$0xf]
    %v541 = vld [vmem:[#allocation5 + $0x44] sm:$0xf]
    %v542 = vld [vmem:[#allocation5 + $0x48] sm:$0xf]
    %v543 = vld [vmem:[#allocation5 + $0x4c] sm:$0xf]
    %v544 = vld [vmem:[#allocation5 + $0x50] sm:$0xf]
    %v545 = vld [vmem:[#allocation5 + $0x54] sm:$0xf]
    %v546 = vld [vmem:[#allocation5 + $0x58] sm:$0xf]
    %v547 = vld [vmem:[#allocation5 + $0x5c] sm:$0xf]
    %v548 = vld [vmem:[#allocation5 + $0x60] sm:$0xf]
    %v549 = vld [vmem:[#allocation5 + $0x64] sm:$0xf]
    %v550 = vld [vmem:[#allocation5 + $0x68] sm:$0xf]
    %v551 = vld [vmem:[#allocation5 + $0x6c] sm:$0xf]
    %v552 = vld [vmem:[#allocation5 + $0x70] sm:$0xf]
    %v553 = vld [vmem:[#allocation5 + $0x74] sm:$0xf]
    %v554 = vld [vmem:[#allocation5 + $0x78] sm:$0xf]
    %v555 = vld [vmem:[#allocation5 + $0x7c] sm:$0xf]
    %v556 = vld [vmem:[#allocation5 + $0x80] sm:$0xf]
    %v557 = vld [vmem:[#allocation5 + $0x84] sm:$0xf]
    %v558 = vld [vmem:[#allocation5 + $0x88] sm:$0xf]
    %v559 = vld [vmem:[#allocation5 + $0x8c] sm:$0xf]
    %v560 = vld [vmem:[#allocation5 + $0x90] sm:$0xf]
    %v561 = vld [vmem:[#allocation5 + $0x94] sm:$0xf]
    %v562 = vld [vmem:[#allocation5 + $0x98] sm:$0xf]
    %v563 = vld [vmem:[#allocation5 + $0x9c] sm:$0xf]
    %v564 = vld [vmem:[#allocation5 + $0xa0] sm:$0xf]
    %v565 = vld [vmem:[#allocation5 + $0xa4] sm:$0xf]
    %v566 = vld [vmem:[#allocation5 + $0xa8] sm:$0xf]
    %v567 = vld [vmem:[#allocation5 + $0xac] sm:$0xf]
    %v568 = vld [vmem:[#allocation5 + $0xb0] sm:$0xf]
    %v569 = vld [vmem:[#allocation5 + $0xb4] sm:$0xf]
    %v570 = vld [vmem:[#allocation5 + $0xb8] sm:$0xf]
    %v571 = vld [vmem:[#allocation5 + $0xbc] sm:$0xf]
    %v572 = vld [vmem:[#allocation5 + $0xc0] sm:$0xf]
    %v573 = vld [vmem:[#allocation5 + $0xc4] sm:$0xf]
    %v574 = vld [vmem:[#allocation5 + $0xc8] sm:$0xf]
    %v575 = vld [vmem:[#allocation5 + $0xcc] sm:$0xf]
    %v576 = vld [vmem:[#allocation5 + $0xd0] sm:$0xf]
    %v577 = vld [vmem:[#allocation5 + $0xd4] sm:$0xf]
    %v578 = vld [vmem:[#allocation5 + $0xd8] sm:$0xf]
    %v579 = vld [vmem:[#allocation5 + $0xdc] sm:$0xf]
    %v580 = vld [vmem:[#allocation5 + $0xe0] sm:$0xf]
    %v581 = vld [vmem:[#allocation5 + $0xe4] sm:$0xf]
    %v582 = vld [vmem:[#allocation5 + $0xe8] sm:$0xf]
    %v583 = vld [vmem:[#allocation5 + $0xec] sm:$0xf]
    %v584 = vld [vmem:[#allocation5 + $0xf0] sm:$0xf]
    %v585 = vld [vmem:[#allocation5 + $0xf4] sm:$0xf]
    %v586 = vld [vmem:[#allocation5 + $0xf8] sm:$0xf]
    %v587 = vld [vmem:[#allocation5 + $0xfc] sm:$0xf]
    %v588 = vld [vmem:[#allocation5 + $0x100] sm:$0xf]
    %v589 = vld [vmem:[#allocation5 + $0x104] sm:$0xf]
    %v590 = vld [vmem:[#allocation5 + $0x108] sm:$0xf]
    %v591 = vld [vmem:[#allocation5 + $0x10c] sm:$0xf]
    %v592 = vld [vmem:[#allocation5 + $0x110] sm:$0xf]
    %v593 = vld [vmem:[#allocation5 + $0x114] sm:$0xf]
    %v594 = vld [vmem:[#allocation5 + $0x118] sm:$0xf]
    %v595 = vld [vmem:[#allocation5 + $0x11c] sm:$0xf]
    %v596 = vld [vmem:[#allocation5 + $0x120] sm:$0xf]
    %v597 = vld [vmem:[#allocation5 + $0x124] sm:$0xf]
    %v598 = vld [vmem:[#allocation5 + $0x128] sm:$0xf]
    %v599 = vld [vmem:[#allocation5 + $0x12c] sm:$0xf]
    %v600 = vld [vmem:[#allocation5 + $0x130] sm:$0xf]
    %v601 = vld [vmem:[#allocation5 + $0x134] sm:$0xf]
    %v602 = vld [vmem:[#allocation5 + $0x138] sm:$0xf]
    %v603 = vld [vmem:[#allocation5 + $0x13c] sm:$0xf]
    %v604 = vld [vmem:[#allocation5 + $0x140] sm:$0xf]
    %v605 = vld [vmem:[#allocation5 + $0x144] sm:$0xf]
    %v606 = vld [vmem:[#allocation5 + $0x148] sm:$0xf]
    %v607 = vld [vmem:[#allocation5 + $0x14c] sm:$0xf]
    %v608 = vld [vmem:[#allocation5 + $0x150] sm:$0xf]
    %v609 = vld [vmem:[#allocation5 + $0x154] sm:$0xf]
    %v610 = vld [vmem:[#allocation5 + $0x158] sm:$0xf]
    %v611 = vld [vmem:[#allocation5 + $0x15c] sm:$0xf]
    %v612 = vld [vmem:[#allocation5 + $0x160] sm:$0xf]
    %v613 = vld [vmem:[#allocation5 + $0x164] sm:$0xf]
    %v614 = vld [vmem:[#allocation5 + $0x168] sm:$0xf]
    %v615 = vld [vmem:[#allocation5 + $0x16c] sm:$0xf]
    %v616 = vld [vmem:[#allocation5 + $0x170] sm:$0xf]
    %v617 = vld [vmem:[#allocation5 + $0x174] sm:$0xf]
    %v618 = vld [vmem:[#allocation5 + $0x178] sm:$0xf]
    %v619 = vld [vmem:[#allocation5 + $0x17c] sm:$0xf]
    %v620 = vld [vmem:[#allocation5 + $0x180] sm:$0xf]
    %v621 = vld [vmem:[#allocation5 + $0x184] sm:$0xf]
    %v622 = vld [vmem:[#allocation5 + $0x188] sm:$0xf]
    %v623 = vld [vmem:[#allocation5 + $0x18c] sm:$0xf]
    %v624 = vld [vmem:[#allocation5 + $0x190] sm:$0xf]
    %v625 = vld [vmem:[#allocation5 + $0x194] sm:$0xf]
    %v626 = vld [vmem:[#allocation5 + $0x198] sm:$0xf]
    %v627 = vld [vmem:[#allocation5 + $0x19c] sm:$0xf]
    %v628 = vld [vmem:[#allocation5 + $0x1a0] sm:$0xf]
    %v629 = vld [vmem:[#allocation5 + $0x1a4] sm:$0xf]
    %v630 = vld [vmem:[#allocation5 + $0x1a8] sm:$0xf]
    %v631 = vld [vmem:[#allocation5 + $0x1ac] sm:$0xf]
    %v632 = vld [vmem:[#allocation5 + $0x1b0] sm:$0xf]
    %v633 = vld [vmem:[#allocation5 + $0x1b4] sm:$0xf]
    %v634 = vld [vmem:[#allocation5 + $0x1b8] sm:$0xf]
    %v635 = vld [vmem:[#allocation5 + $0x1bc] sm:$0xf]
    %v636 = vld [vmem:[#allocation5 + $0x1c0] sm:$0xf]
    %v637 = vld [vmem:[#allocation5 + $0x1c4] sm:$0xf]
    %v638 = vld [vmem:[#allocation5 + $0x1c8] sm:$0xf]
    %v639 = vld [vmem:[#allocation5 + $0x1cc] sm:$0xf]
    %v640 = vld [vmem:[#allocation5 + $0x1d0] sm:$0xf]
    %v641 = vld [vmem:[#allocation5 + $0x1d4] sm:$0xf]
    %v642 = vld [vmem:[#allocation5 + $0x1d8] sm:$0xf]
    %v643 = vld [vmem:[#allocation5 + $0x1dc] sm:$0xf]
    %v644 = vld [vmem:[#allocation5 + $0x1e0] sm:$0xf]
    %v645 = vld [vmem:[#allocation5 + $0x1e4] sm:$0xf]
    %v646 = vld [vmem:[#allocation5 + $0x1e8] sm:$0xf]
    %v647 = vld [vmem:[#allocation5 + $0x1ec] sm:$0xf]
    %v648 = vld [vmem:[#allocation5 + $0x1f0] sm:$0xf]
    %v649 = vld [vmem:[#allocation5 + $0x1f4] sm:$0xf]
    %v650 = vld [vmem:[#allocation5 + $0x1f8] sm:$0xf]
    %v651 = vld [vmem:[#allocation5 + $0x1fc] sm:$0xf]
    %v652 = vld [vmem:[#allocation5 + $0x200] sm:$0xf]
    %v653 = vld [vmem:[#allocation5 + $0x204] sm:$0xf]
    %v654 = vld [vmem:[#allocation5 + $0x208] sm:$0xf]
    %v655 = vld [vmem:[#allocation5 + $0x20c] sm:$0xf]
    %v656 = vld [vmem:[#allocation5 + $0x210] sm:$0xf]
    %v657 = vld [vmem:[#allocation5 + $0x214] sm:$0xf]
    %v658 = vld [vmem:[#allocation5 + $0x218] sm:$0xf]
    %v659 = vld [vmem:[#allocation5 + $0x21c] sm:$0xf]
    %v660 = vld [vmem:[#allocation5 + $0x220] sm:$0xf]
    %v661 = vld [vmem:[#allocation5 + $0x224] sm:$0xf]
    %v662 = vld [vmem:[#allocation5 + $0x228] sm:$0xf]
    %v663 = vld [vmem:[#allocation5 + $0x22c] sm:$0xf]
    %v664 = vld [vmem:[#allocation5 + $0x230] sm:$0xf]
    %v665 = vld [vmem:[#allocation5 + $0x234] sm:$0xf]
    %v666 = vld [vmem:[#allocation5 + $0x238] sm:$0xf]
    %v667 = vld [vmem:[#allocation5 + $0x23c] sm:$0xf]
    %v668 = vld [vmem:[#allocation5 + $0x240] sm:$0xf]
    %v669 = vld [vmem:[#allocation5 + $0x244] sm:$0xf]
    %v670 = vld [vmem:[#allocation5 + $0x248] sm:$0xf]
    %v671 = vld [vmem:[#allocation5 + $0x24c] sm:$0xf]
    %v672 = vld [vmem:[#allocation5 + $0x250] sm:$0xf]
    %v673 = vld [vmem:[#allocation5 + $0x254] sm:$0xf]
    %v674 = vld [vmem:[#allocation5 + $0x258] sm:$0xf]
    %v675 = vld [vmem:[#allocation5 + $0x25c] sm:$0xf]
    %v676 = vld [vmem:[#allocation5 + $0x260] sm:$0xf]
    %v677 = vld [vmem:[#allocation5 + $0x264] sm:$0xf]
    %v678 = vld [vmem:[#allocation5 + $0x268] sm:$0xf]
    %v679 = vld [vmem:[#allocation5 + $0x26c] sm:$0xf]
    %v680 = vld [vmem:[#allocation5 + $0x270] sm:$0xf]
    %v681 = vld [vmem:[#allocation5 + $0x274] sm:$0xf]
    %v682 = vld [vmem:[#allocation5 + $0x278] sm:$0xf]
    %v683 = vld [vmem:[#allocation5 + $0x27c] sm:$0xf]
    %v684 = vld [vmem:[#allocation5 + $0x280] sm:$0xf]
    %v685 = vld [vmem:[#allocation5 + $0x284] sm:$0xf]
    %v686 = vld [vmem:[#allocation5 + $0x288] sm:$0xf]
    %v687 = vld [vmem:[#allocation5 + $0x28c] sm:$0xf]
    %v688 = vld [vmem:[#allocation5 + $0x290] sm:$0xf]
    %v689 = vld [vmem:[#allocation5 + $0x294] sm:$0xf]
    %v690 = vld [vmem:[#allocation5 + $0x298] sm:$0xf]
    %v691 = vld [vmem:[#allocation5 + $0x29c] sm:$0xf]
    %v692 = vld [vmem:[#allocation5 + $0x2a0] sm:$0xf]
    %v693 = vld [vmem:[#allocation5 + $0x2a4] sm:$0xf]
    %v694 = vld [vmem:[#allocation5 + $0x2a8] sm:$0xf]
    %v695 = vld [vmem:[#allocation5 + $0x2ac] sm:$0xf]
    %v696 = vld [vmem:[#allocation5 + $0x2b0] sm:$0xf]
    %v697 = vld [vmem:[#allocation5 + $0x2b4] sm:$0xf]
    %v698 = vld [vmem:[#allocation5 + $0x2b8] sm:$0xf]
    %v699 = vld [vmem:[#allocation5 + $0x2bc] sm:$0xf]
    %v700 = vld [vmem:[#allocation5 + $0x2c0] sm:$0xf]
    %v701 = vld [vmem:[#allocation5 + $0x2c4] sm:$0xf]
    %v702 = vld [vmem:[#allocation5 + $0x2c8] sm:$0xf]
    %v703 = vld [vmem:[#allocation5 + $0x2cc] sm:$0xf]
    %v704 = vld [vmem:[#allocation5 + $0x2d0] sm:$0xf]
    %v705 = vld [vmem:[#allocation5 + $0x2d4] sm:$0xf]
    %v706 = vld [vmem:[#allocation5 + $0x2d8] sm:$0xf]
    %v707 = vld [vmem:[#allocation5 + $0x2dc] sm:$0xf]
    %v708 = vld [vmem:[#allocation5 + $0x2e0] sm:$0xf]
    %v709 = vld [vmem:[#allocation5 + $0x2e4] sm:$0xf]
    %v710 = vld [vmem:[#allocation5 + $0x2e8] sm:$0xf]
    %v711 = vld [vmem:[#allocation5 + $0x2ec] sm:$0xf]
    %v712 = vld [vmem:[#allocation5 + $0x2f0] sm:$0xf]
    %v713 = vld [vmem:[#allocation5 + $0x2f4] sm:$0xf]
    %v714 = vld [vmem:[#allocation5 + $0x2f8] sm:$0xf]
    %v715 = vld [vmem:[#allocation5 + $0x2fc] sm:$0xf]
    %v716 = vld [vmem:[#allocation5 + $0x300] sm:$0xf]
    %v717 = vld [vmem:[#allocation5 + $0x304] sm:$0xf]
    %v718 = vld [vmem:[#allocation5 + $0x308] sm:$0xf]
    %v719 = vld [vmem:[#allocation5 + $0x30c] sm:$0xf]
    %v720 = vld [vmem:[#allocation5 + $0x310] sm:$0xf]
    %v721 = vld [vmem:[#allocation5 + $0x314] sm:$0xf]
    %v722 = vld [vmem:[#allocation5 + $0x318] sm:$0xf]
    %v723 = vld [vmem:[#allocation5 + $0x31c] sm:$0xf]
    %v724 = vld [vmem:[#allocation5 + $0x320] sm:$0xf]
    %v725 = vld [vmem:[#allocation5 + $0x324] sm:$0xf]
    %v726 = vld [vmem:[#allocation5 + $0x328] sm:$0xf]
    %v727 = vld [vmem:[#allocation5 + $0x32c] sm:$0xf]
    %v728 = vld [vmem:[#allocation5 + $0x330] sm:$0xf]
    %v729 = vld [vmem:[#allocation5 + $0x334] sm:$0xf]
    %v730 = vld [vmem:[#allocation5 + $0x338] sm:$0xf]
    %v731 = vld [vmem:[#allocation5 + $0x33c] sm:$0xf]
    %v732 = vld [vmem:[#allocation5 + $0x340] sm:$0xf]
    %v733 = vld [vmem:[#allocation5 + $0x344] sm:$0xf]
    %v734 = vld [vmem:[#allocation5 + $0x348] sm:$0xf]
    %v735 = vld [vmem:[#allocation5 + $0x34c] sm:$0xf]
    %v736 = vld [vmem:[#allocation5 + $0x350] sm:$0xf]
    %v737 = vld [vmem:[#allocation5 + $0x354] sm:$0xf]
    %v738 = vld [vmem:[#allocation5 + $0x358] sm:$0xf]
    %v739 = vld [vmem:[#allocation5 + $0x35c] sm:$0xf]
    %v740 = vld [vmem:[#allocation5 + $0x360] sm:$0xf]
    %v741 = vld [vmem:[#allocation5 + $0x364] sm:$0xf]
    %v742 = vld [vmem:[#allocation5 + $0x368] sm:$0xf]
    %v743 = vld [vmem:[#allocation5 + $0x36c] sm:$0xf]
    %v744 = vld [vmem:[#allocation5 + $0x370] sm:$0xf]
    %v745 = vld [vmem:[#allocation5 + $0x374] sm:$0xf]
    %v746 = vld [vmem:[#allocation5 + $0x378] sm:$0xf]
    %v747 = vld [vmem:[#allocation5 + $0x37c] sm:$0xf]
    %v748 = vld [vmem:[#allocation5 + $0x380] sm:$0xf]
    %v749 = vld [vmem:[#allocation5 + $0x384] sm:$0xf]
    %v750 = vld [vmem:[#allocation5 + $0x388] sm:$0xf]
    %v751 = vld [vmem:[#allocation5 + $0x38c] sm:$0xf]
    %v752 = vld [vmem:[#allocation5 + $0x390] sm:$0xf]
    %v753 = vld [vmem:[#allocation5 + $0x394] sm:$0xf]
    %v754 = vld [vmem:[#allocation5 + $0x398] sm:$0xf]
    %v755 = vld [vmem:[#allocation5 + $0x39c] sm:$0xf]
    %v756 = vld [vmem:[#allocation5 + $0x3a0] sm:$0xf]
    %v757 = vld [vmem:[#allocation5 + $0x3a4] sm:$0xf]
    %v758 = vld [vmem:[#allocation5 + $0x3a8] sm:$0xf]
    %v759 = vld [vmem:[#allocation5 + $0x3ac] sm:$0xf]
    %v760 = vld [vmem:[#allocation5 + $0x3b0] sm:$0xf]
    %v761 = vld [vmem:[#allocation5 + $0x3b4] sm:$0xf]
    %v762 = vld [vmem:[#allocation5 + $0x3b8] sm:$0xf]
    %v763 = vld [vmem:[#allocation5 + $0x3bc] sm:$0xf]
    %v764 = vld [vmem:[#allocation5 + $0x3c0] sm:$0xf]
    %v765 = vld [vmem:[#allocation5 + $0x3c4] sm:$0xf]
    %v766 = vld [vmem:[#allocation5 + $0x3c8] sm:$0xf]
    %v767 = vld [vmem:[#allocation5 + $0x3cc] sm:$0xf]
    %v768 = vld [vmem:[#allocation5 + $0x3d0] sm:$0xf]
    %v769 = vld [vmem:[#allocation5 + $0x3d4] sm:$0xf]
    %v770 = vld [vmem:[#allocation5 + $0x3d8] sm:$0xf]
    %v771 = vld [vmem:[#allocation5 + $0x3dc] sm:$0xf]
    %v772 = vld [vmem:[#allocation5 + $0x3e0] sm:$0xf]
    %v773 = vld [vmem:[#allocation5 + $0x3e4] sm:$0xf]
    %v774 = vld [vmem:[#allocation5 + $0x3e8] sm:$0xf]
    %v775 = vld [vmem:[#allocation5 + $0x3ec] sm:$0xf]
    %v776 = vld [vmem:[#allocation5 + $0x3f0] sm:$0xf]
    %v777 = vld [vmem:[#allocation5 + $0x3f4] sm:$0xf]
    %v778 = vld [vmem:[#allocation5 + $0x3f8] sm:$0xf]
    %v779 = vld [vmem:[#allocation5 + $0x3fc] sm:$0xf]
    %v780 = vld [vmem:[#allocation5 + $0x400] sm:$0xf]
    %v781 = vld [vmem:[#allocation5 + $0x404] sm:$0xf]
    %v782 = vld [vmem:[#allocation5 + $0x408] sm:$0xf]
    %v783 = vld [vmem:[#allocation5 + $0x40c] sm:$0xf]
    %v784 = vld [vmem:[#allocation5 + $0x410] sm:$0xf]
    %v785 = vld [vmem:[#allocation5 + $0x414] sm:$0xf]
    %v786 = vld [vmem:[#allocation5 + $0x418] sm:$0xf]
    %v787 = vld [vmem:[#allocation5 + $0x41c] sm:$0xf]
    %v788 = vld [vmem:[#allocation5 + $0x420] sm:$0xf]
    %v789 = vld [vmem:[#allocation5 + $0x424] sm:$0xf]
    %v790 = vld [vmem:[#allocation5 + $0x428] sm:$0xf]
    %v791 = vld [vmem:[#allocation5 + $0x42c] sm:$0xf]
    %v792 = vld [vmem:[#allocation5 + $0x430] sm:$0xf]
    %v793 = vld [vmem:[#allocation5 + $0x434] sm:$0xf]
    %v794 = vld [vmem:[#allocation5 + $0x438] sm:$0xf]
    %v795 = vld [vmem:[#allocation5 + $0x43c] sm:$0xf]
    %v796 = vld [vmem:[#allocation5 + $0x440] sm:$0xf]
    %v797 = vld [vmem:[#allocation5 + $0x444] sm:$0xf]
    %v798 = vld [vmem:[#allocation5 + $0x448] sm:$0xf]
    %v799 = vld [vmem:[#allocation5 + $0x44c] sm:$0xf]
    %v800 = vld [vmem:[#allocation5 + $0x450] sm:$0xf]
    %v801 = vld [vmem:[#allocation5 + $0x454] sm:$0xf]
    %v802 = vld [vmem:[#allocation5 + $0x458] sm:$0xf]
    %v803 = vld [vmem:[#allocation5 + $0x45c] sm:$0xf]
    %v804 = vld [vmem:[#allocation5 + $0x460] sm:$0xf]
    %v805 = vld [vmem:[#allocation5 + $0x464] sm:$0xf]
    %v806 = vld [vmem:[#allocation5 + $0x468] sm:$0xf]
    %v807 = vld [vmem:[#allocation5 + $0x46c] sm:$0xf]
    %v808 = vld [vmem:[#allocation5 + $0x470] sm:$0xf]
    %v809 = vld [vmem:[#allocation5 + $0x474] sm:$0xf]
    %v810 = vld [vmem:[#allocation5 + $0x478] sm:$0xf]
    %v811 = vld [vmem:[#allocation5 + $0x47c] sm:$0xf]
    %v812 = vld [vmem:[#allocation5 + $0x480] sm:$0xf]
    %v813 = vld [vmem:[#allocation5 + $0x484] sm:$0xf]
    %v814 = vld [vmem:[#allocation5 + $0x488] sm:$0xf]
    %v815 = vld [vmem:[#allocation5 + $0x48c] sm:$0xf]
    %v816 = vld [vmem:[#allocation5 + $0x490] sm:$0xf]
    %v817 = vld [vmem:[#allocation5 + $0x494] sm:$0xf]
    %v818 = vld [vmem:[#allocation5 + $0x498] sm:$0xf]
    %v819 = vld [vmem:[#allocation5 + $0x49c] sm:$0xf]
    %v820 = vld [vmem:[#allocation5 + $0x4a0] sm:$0xf]
    %v821 = vld [vmem:[#allocation5 + $0x4a4] sm:$0xf]
    %v822 = vld [vmem:[#allocation5 + $0x4a8] sm:$0xf]
    %v823 = vld [vmem:[#allocation5 + $0x4ac] sm:$0xf]
    %v824 = vld [vmem:[#allocation5 + $0x4b0] sm:$0xf]
    %v825 = vld [vmem:[#allocation5 + $0x4b4] sm:$0xf]
    %v826 = vld [vmem:[#allocation5 + $0x4b8] sm:$0xf]
    %v827 = vld [vmem:[#allocation5 + $0x4bc] sm:$0xf]
    %v828 = vld [vmem:[#allocation5 + $0x4c0] sm:$0xf]
    %v829 = vld [vmem:[#allocation5 + $0x4c4] sm:$0xf]
    %v830 = vld [vmem:[#allocation5 + $0x4c8] sm:$0xf]
    %v831 = vld [vmem:[#allocation5 + $0x4cc] sm:$0xf]
    %v832 = vld [vmem:[#allocation5 + $0x4d0] sm:$0xf]
    %v833 = vld [vmem:[#allocation5 + $0x4d4] sm:$0xf]
    %v834 = vld [vmem:[#allocation5 + $0x4d8] sm:$0xf]
    %v835 = vld [vmem:[#allocation5 + $0x4dc] sm:$0xf]
    %v836 = vld [vmem:[#allocation5 + $0x4e0] sm:$0xf]
    %v837 = vld [vmem:[#allocation5 + $0x4e4] sm:$0xf]
    %v838 = vld [vmem:[#allocation5 + $0x4e8] sm:$0xf]
    %v839 = vld [vmem:[#allocation5 + $0x4ec] sm:$0xf]
    %v840 = vld [vmem:[#allocation5 + $0x4f0] sm:$0xf]
    %v841 = vld [vmem:[#allocation5 + $0x4f4] sm:$0xf]
    %v842 = vld [vmem:[#allocation5 + $0x4f8] sm:$0xf]
    %v843 = vld [vmem:[#allocation5 + $0x4fc] sm:$0xf]
    %v844 = vld [vmem:[#allocation5 + $0x500] sm:$0xf]
    %v845 = vld [vmem:[#allocation5 + $0x504] sm:$0xf]
    %v846 = vld [vmem:[#allocation5 + $0x508] sm:$0xf]
    %v847 = vld [vmem:[#allocation5 + $0x50c] sm:$0xf]
    %v848 = vld [vmem:[#allocation5 + $0x510] sm:$0xf]
    %v849 = vld [vmem:[#allocation5 + $0x514] sm:$0xf]
    %v850 = vld [vmem:[#allocation5 + $0x518] sm:$0xf]
    %v851 = vld [vmem:[#allocation5 + $0x51c] sm:$0xf]
    %v852 = vld [vmem:[#allocation5 + $0x520] sm:$0xf]
    %v853 = vld [vmem:[#allocation5 + $0x524] sm:$0xf]
    %v854 = vld [vmem:[#allocation5 + $0x528] sm:$0xf]
    %v855 = vld [vmem:[#allocation5 + $0x52c] sm:$0xf]
    %v856 = vld [vmem:[#allocation5 + $0x530] sm:$0xf]
    %v857 = vld [vmem:[#allocation5 + $0x534] sm:$0xf]
    %v858 = vld [vmem:[#allocation5 + $0x538] sm:$0xf]
    %v859 = vld [vmem:[#allocation5 + $0x53c] sm:$0xf]
    %v860 = vld [vmem:[#allocation5 + $0x540] sm:$0xf]
    %v861 = vld [vmem:[#allocation5 + $0x544] sm:$0xf]
    %v862 = vld [vmem:[#allocation5 + $0x548] sm:$0xf]
    %v863 = vld [vmem:[#allocation5 + $0x54c] sm:$0xf]
    %v864 = vld [vmem:[#allocation5 + $0x550] sm:$0xf]
    %v865 = vld [vmem:[#allocation5 + $0x554] sm:$0xf]
    %v866 = vld [vmem:[#allocation5 + $0x558] sm:$0xf]
    %v867 = vld [vmem:[#allocation5 + $0x55c] sm:$0xf]
    %v868 = vld [vmem:[#allocation5 + $0x560] sm:$0xf]
    %v869 = vld [vmem:[#allocation5 + $0x564] sm:$0xf]
    %v870 = vld [vmem:[#allocation5 + $0x568] sm:$0xf]
    %v871 = vld [vmem:[#allocation5 + $0x56c] sm:$0xf]
    %v872 = vld [vmem:[#allocation5 + $0x570] sm:$0xf]
    %v873 = vld [vmem:[#allocation5 + $0x574] sm:$0xf]
    %v874 = vld [vmem:[#allocation5 + $0x578] sm:$0xf]
    %v875 = vld [vmem:[#allocation5 + $0x57c] sm:$0xf]
    %v876 = vld [vmem:[#allocation5 + $0x580] sm:$0xf]
    %v877 = vld [vmem:[#allocation5 + $0x584] sm:$0xf]
    %v878 = vld [vmem:[#allocation5 + $0x588] sm:$0xf]
    %v879 = vld [vmem:[#allocation5 + $0x58c] sm:$0xf]
    %v880 = vld [vmem:[#allocation5 + $0x590] sm:$0xf]
    %v881 = vld [vmem:[#allocation5 + $0x594] sm:$0xf]
    %v882 = vld [vmem:[#allocation5 + $0x598] sm:$0xf]
    %v883 = vld [vmem:[#allocation5 + $0x59c] sm:$0xf]
    %v884 = vld [vmem:[#allocation5 + $0x5a0] sm:$0xf]
    %v885 = vld [vmem:[#allocation5 + $0x5a4] sm:$0xf]
    %v886 = vld [vmem:[#allocation5 + $0x5a8] sm:$0xf]
    %v887 = vld [vmem:[#allocation5 + $0x5ac] sm:$0xf]
    %v888 = vld [vmem:[#allocation5 + $0x5b0] sm:$0xf]
    %v889 = vld [vmem:[#allocation5 + $0x5b4] sm:$0xf]
    %v890 = vld [vmem:[#allocation5 + $0x5b8] sm:$0xf]
    %v891 = vld [vmem:[#allocation5 + $0x5bc] sm:$0xf]
    %v892 = vld [vmem:[#allocation5 + $0x5c0] sm:$0xf]
    %v893 = vld [vmem:[#allocation5 + $0x5c4] sm:$0xf]
    %v894 = vld [vmem:[#allocation5 + $0x5c8] sm:$0xf]
    %v895 = vld [vmem:[#allocation5 + $0x5cc] sm:$0xf]
    %v896 = vld [vmem:[#allocation5 + $0x5d0] sm:$0xf]
    %v897 = vld [vmem:[#allocation5 + $0x5d4] sm:$0xf]
    %v898 = vld [vmem:[#allocation5 + $0x5d8] sm:$0xf]
    %v899 = vld [vmem:[#allocation5 + $0x5dc] sm:$0xf]
    %v900 = vld [vmem:[#allocation5 + $0x5e0] sm:$0xf]
    %v901 = vld [vmem:[#allocation5 + $0x5e4] sm:$0xf]
    %v902 = vld [vmem:[#allocation5 + $0x5e8] sm:$0xf]
    %v903 = vld [vmem:[#allocation5 + $0x5ec] sm:$0xf]
    %v904 = vld [vmem:[#allocation5 + $0x5f0] sm:$0xf]
    %v905 = vld [vmem:[#allocation5 + $0x5f4] sm:$0xf]
    %v906 = vld [vmem:[#allocation5 + $0x5f8] sm:$0xf]
    %v907 = vld [vmem:[#allocation5 + $0x5fc] sm:$0xf]
    %v908 = vld [vmem:[#allocation5 + $0x600] sm:$0xf]
    %v909 = vld [vmem:[#allocation5 + $0x604] sm:$0xf]
    %v910 = vld [vmem:[#allocation5 + $0x608] sm:$0xf]
    %v911 = vld [vmem:[#allocation5 + $0x60c] sm:$0xf]
    %v912 = vld [vmem:[#allocation5 + $0x610] sm:$0xf]
    %v913 = vld [vmem:[#allocation5 + $0x614] sm:$0xf]
    %v914 = vld [vmem:[#allocation5 + $0x618] sm:$0xf]
    %v915 = vld [vmem:[#allocation5 + $0x61c] sm:$0xf]
    %v916 = vld [vmem:[#allocation5 + $0x620] sm:$0xf]
    %v917 = vld [vmem:[#allocation5 + $0x624] sm:$0xf]
    %v918 = vld [vmem:[#allocation5 + $0x628] sm:$0xf]
    %v919 = vld [vmem:[#allocation5 + $0x62c] sm:$0xf]
    %v920 = vld [vmem:[#allocation5 + $0x630] sm:$0xf]
    %v921 = vld [vmem:[#allocation5 + $0x634] sm:$0xf]
    %v922 = vld [vmem:[#allocation5 + $0x638] sm:$0xf]
    %v923 = vld [vmem:[#allocation5 + $0x63c] sm:$0xf]
    %v924 = vld [vmem:[#allocation5 + $0x640] sm:$0xf]
    %v925 = vld [vmem:[#allocation5 + $0x644] sm:$0xf]
    %v926 = vld [vmem:[#allocation5 + $0x648] sm:$0xf]
    %v927 = vld [vmem:[#allocation5 + $0x64c] sm:$0xf]
    %v928 = vld [vmem:[#allocation5 + $0x650] sm:$0xf]
    %v929 = vld [vmem:[#allocation5 + $0x654] sm:$0xf]
    %v930 = vld [vmem:[#allocation5 + $0x658] sm:$0xf]
    %v931 = vld [vmem:[#allocation5 + $0x65c] sm:$0xf]
    %v932 = vld [vmem:[#allocation5 + $0x660] sm:$0xf]
    %v933 = vld [vmem:[#allocation5 + $0x664] sm:$0xf]
    %v934 = vld [vmem:[#allocation5 + $0x668] sm:$0xf]
    %v935 = vld [vmem:[#allocation5 + $0x66c] sm:$0xf]
    %v936 = vld [vmem:[#allocation5 + $0x670] sm:$0xf]
    %v937 = vld [vmem:[#allocation5 + $0x674] sm:$0xf]
    %v938 = vld [vmem:[#allocation5 + $0x678] sm:$0xf]
    %v939 = vld [vmem:[#allocation5 + $0x67c] sm:$0xf]
    %v940 = vld [vmem:[#allocation5 + $0x680] sm:$0xf]
    %v941 = vld [vmem:[#allocation5 + $0x684] sm:$0xf]
    %v942 = vld [vmem:[#allocation5 + $0x688] sm:$0xf]
    %v943 = vld [vmem:[#allocation5 + $0x68c] sm:$0xf]
    %v944 = vld [vmem:[#allocation5 + $0x690] sm:$0xf]
    %v945 = vld [vmem:[#allocation5 + $0x694] sm:$0xf]
    %v946 = vld [vmem:[#allocation5 + $0x698] sm:$0xf]
    %v947 = vld [vmem:[#allocation5 + $0x69c] sm:$0xf]
    %v948 = vld [vmem:[#allocation5 + $0x6a0] sm:$0xf]
    %v949 = vld [vmem:[#allocation5 + $0x6a4] sm:$0xf]
    %v950 = vld [vmem:[#allocation5 + $0x6a8] sm:$0xf]
    %v951 = vld [vmem:[#allocation5 + $0x6ac] sm:$0xf]
    %v952 = vld [vmem:[#allocation5 + $0x6b0] sm:$0xf]
    %v953 = vld [vmem:[#allocation5 + $0x6b4] sm:$0xf]
    %v954 = vld [vmem:[#allocation5 + $0x6b8] sm:$0xf]
    %v955 = vld [vmem:[#allocation5 + $0x6bc] sm:$0xf]
    %v956 = vld [vmem:[#allocation5 + $0x6c0] sm:$0xf]
    %v957 = vld [vmem:[#allocation5 + $0x6c4] sm:$0xf]
    %v958 = vld [vmem:[#allocation5 + $0x6c8] sm:$0xf]
    %v959 = vld [vmem:[#allocation5 + $0x6cc] sm:$0xf]
    %v960 = vld [vmem:[#allocation5 + $0x6d0] sm:$0xf]
    %v961 = vld [vmem:[#allocation5 + $0x6d4] sm:$0xf]
    %v962 = vld [vmem:[#allocation5 + $0x6d8] sm:$0xf]
    %v963 = vld [vmem:[#allocation5 + $0x6dc] sm:$0xf]
    %v964 = vld [vmem:[#allocation5 + $0x6e0] sm:$0xf]
    %v965 = vld [vmem:[#allocation5 + $0x6e4] sm:$0xf]
    %v966 = vld [vmem:[#allocation5 + $0x6e8] sm:$0xf]
    %v967 = vld [vmem:[#allocation5 + $0x6ec] sm:$0xf]
    %v968 = vld [vmem:[#allocation5 + $0x6f0] sm:$0xf]
    %v969 = vld [vmem:[#allocation5 + $0x6f4] sm:$0xf]
    %v970 = vld [vmem:[#allocation5 + $0x6f8] sm:$0xf]
    %v971 = vld [vmem:[#allocation5 + $0x6fc] sm:$0xf]
    %v972 = vld [vmem:[#allocation5 + $0x700] sm:$0xf]
    %v973 = vld [vmem:[#allocation5 + $0x704] sm:$0xf]
    %v974 = vld [vmem:[#allocation5 + $0x708] sm:$0xf]
    %v975 = vld [vmem:[#allocation5 + $0x70c] sm:$0xf]
    %v976 = vld [vmem:[#allocation5 + $0x710] sm:$0xf]
    %v977 = vld [vmem:[#allocation5 + $0x714] sm:$0xf]
    %v978 = vld [vmem:[#allocation5 + $0x718] sm:$0xf]
    %v979 = vld [vmem:[#allocation5 + $0x71c] sm:$0xf]
    %v980 = vld [vmem:[#allocation5 + $0x720] sm:$0xf]
    %v981 = vld [vmem:[#allocation5 + $0x724] sm:$0xf]
    %v982 = vld [vmem:[#allocation5 + $0x728] sm:$0xf]
    %v983 = vld [vmem:[#allocation5 + $0x72c] sm:$0xf]
    %v984 = vld [vmem:[#allocation5 + $0x730] sm:$0xf]
    %v985 = vld [vmem:[#allocation5 + $0x734] sm:$0xf]
    %v986 = vld [vmem:[#allocation5 + $0x738] sm:$0xf]
    %v987 = vld [vmem:[#allocation5 + $0x73c] sm:$0xf]
    %v988 = vld [vmem:[#allocation5 + $0x740] sm:$0xf]
    %v989 = vld [vmem:[#allocation5 + $0x744] sm:$0xf]
    %v990 = vld [vmem:[#allocation5 + $0x748] sm:$0xf]
    %v991 = vld [vmem:[#allocation5 + $0x74c] sm:$0xf]
    %v992 = vld [vmem:[#allocation5 + $0x750] sm:$0xf]
    %v993 = vld [vmem:[#allocation5 + $0x754] sm:$0xf]
    %v994 = vld [vmem:[#allocation5 + $0x758] sm:$0xf]
    %v995 = vld [vmem:[#allocation5 + $0x75c] sm:$0xf]
    %v996 = vld [vmem:[#allocation5 + $0x760] sm:$0xf]
    %v997 = vld [vmem:[#allocation5 + $0x764] sm:$0xf]
    %v998 = vld [vmem:[#allocation5 + $0x768] sm:$0xf]
    %v999 = vld [vmem:[#allocation5 + $0x76c] sm:$0xf]
    %v1000 = vld [vmem:[#allocation5 + $0x770] sm:$0xf]
    %v1001 = vld [vmem:[#allocation5 + $0x774] sm:$0xf]
    %v1002 = vld [vmem:[#allocation5 + $0x778] sm:$0xf]
    %v1003 = vld [vmem:[#allocation5 + $0x77c] sm:$0xf]
    %v1004 = vld [vmem:[#allocation5 + $0x780] sm:$0xf]
    %v1005 = vld [vmem:[#allocation5 + $0x784] sm:$0xf]
    %v1006 = vld [vmem:[#allocation5 + $0x788] sm:$0xf]
    %v1007 = vld [vmem:[#allocation5 + $0x78c] sm:$0xf]
    %v1008 = vld [vmem:[#allocation5 + $0x790] sm:$0xf]
    %v1009 = vld [vmem:[#allocation5 + $0x794] sm:$0xf]
    %v1010 = vld [vmem:[#allocation5 + $0x798] sm:$0xf]
    %v1011 = vld [vmem:[#allocation5 + $0x79c] sm:$0xf]
    %v1012 = vld [vmem:[#allocation5 + $0x7a0] sm:$0xf]
    %v1013 = vld [vmem:[#allocation5 + $0x7a4] sm:$0xf]
    %v1014 = vld [vmem:[#allocation5 + $0x7a8] sm:$0xf]
    %v1015 = vld [vmem:[#allocation5 + $0x7ac] sm:$0xf]
    %v1016 = vld [vmem:[#allocation5 + $0x7b0] sm:$0xf]
    %v1017 = vld [vmem:[#allocation5 + $0x7b4] sm:$0xf]
    %v1018 = vld [vmem:[#allocation5 + $0x7b8] sm:$0xf]
    %v1019 = vld [vmem:[#allocation5 + $0x7bc] sm:$0xf]
    %v1020 = vld [vmem:[#allocation5 + $0x7c0] sm:$0xf]
    %v1021 = vld [vmem:[#allocation5 + $0x7c4] sm:$0xf]
    %v1022 = vld [vmem:[#allocation5 + $0x7c8] sm:$0xf]
    %v1023 = vld [vmem:[#allocation5 + $0x7cc] sm:$0xf]
    %v1024 = vld [vmem:[#allocation5 + $0x7d0] sm:$0xf]
    %v1025 = vld [vmem:[#allocation5 + $0x7d4] sm:$0xf]
    %v1026 = vld [vmem:[#allocation5 + $0x7d8] sm:$0xf]
    %v1027 = vld [vmem:[#allocation5 + $0x7dc] sm:$0xf]
    %v1028 = vld [vmem:[#allocation5 + $0x7e0] sm:$0xf]
    %v1029 = vld [vmem:[#allocation5 + $0x7e4] sm:$0xf]
    %v1030 = vld [vmem:[#allocation5 + $0x7e8] sm:$0xf]
    %v1031 = vld [vmem:[#allocation5 + $0x7ec] sm:$0xf]
    %v1032 = vld [vmem:[#allocation5 + $0x7f0] sm:$0xf]
    %v1033 = vld [vmem:[#allocation5 + $0x7f4] sm:$0xf]
    %v1034 = vld [vmem:[#allocation5 + $0x7f8] sm:$0xf]
    %v1035 = vld [vmem:[#allocation5 + $0x7fc] sm:$0xf]
    %v1548 = vunpack.c.l.b16 %v524
    %v1549 = vunpack.c.l.b16 %v525
    %v1550 = vunpack.c.l.b16 %v526
    %v1551 = vunpack.c.l.b16 %v527
    %v1552 = vunpack.c.l.b16 %v528
    %v1553 = vunpack.c.l.b16 %v529
    %v1554 = vunpack.c.l.b16 %v530
    %v1555 = vunpack.c.l.b16 %v531
    %v1556 = vunpack.c.l.b16 %v532
    %v1557 = vunpack.c.l.b16 %v533
    %v1558 = vunpack.c.l.b16 %v534
    %v1559 = vunpack.c.l.b16 %v535
    %v1560 = vunpack.c.l.b16 %v536
    %v1561 = vunpack.c.l.b16 %v537
    %v1562 = vunpack.c.l.b16 %v538
    %v1563 = vunpack.c.l.b16 %v539
    %v1564 = vunpack.c.l.b16 %v540
    %v1565 = vunpack.c.l.b16 %v541
    %v1566 = vunpack.c.l.b16 %v542
    %v1567 = vunpack.c.l.b16 %v543
    %v1568 = vunpack.c.l.b16 %v544
    %v1569 = vunpack.c.l.b16 %v545
    %v1570 = vunpack.c.l.b16 %v546
    %v1571 = vunpack.c.l.b16 %v547
    %v1572 = vunpack.c.l.b16 %v548
    %v1573 = vunpack.c.l.b16 %v549
    %v1574 = vunpack.c.l.b16 %v550
    %v1575 = vunpack.c.l.b16 %v551
    %v1576 = vunpack.c.l.b16 %v552
    %v1577 = vunpack.c.l.b16 %v553
    %v1578 = vunpack.c.l.b16 %v554
    %v1579 = vunpack.c.l.b16 %v555
    %v1580 = vunpack.c.l.b16 %v556
    %v1581 = vunpack.c.l.b16 %v557
    %v1582 = vunpack.c.l.b16 %v558
    %v1583 = vunpack.c.l.b16 %v559
    %v1584 = vunpack.c.l.b16 %v560
    %v1585 = vunpack.c.l.b16 %v561
    %v1586 = vunpack.c.l.b16 %v562
    %v1587 = vunpack.c.l.b16 %v563
    %v1588 = vunpack.c.l.b16 %v564
    %v1589 = vunpack.c.l.b16 %v565
    %v1590 = vunpack.c.l.b16 %v566
    %v1591 = vunpack.c.l.b16 %v567
    %v1592 = vunpack.c.l.b16 %v568
    %v1593 = vunpack.c.l.b16 %v569
    %v1594 = vunpack.c.l.b16 %v570
    %v1595 = vunpack.c.l.b16 %v571
    %v1596 = vunpack.c.l.b16 %v572
    %v1597 = vunpack.c.l.b16 %v573
    %v1598 = vunpack.c.l.b16 %v574
    %v1599 = vunpack.c.l.b16 %v575
    %v1600 = vunpack.c.l.b16 %v576
    %v1601 = vunpack.c.l.b16 %v577
    %v1602 = vunpack.c.l.b16 %v578
    %v1603 = vunpack.c.l.b16 %v579
    %v1604 = vunpack.c.l.b16 %v580
    %v1605 = vunpack.c.l.b16 %v581
    %v1606 = vunpack.c.l.b16 %v582
    %v1607 = vunpack.c.l.b16 %v583
    %v1608 = vunpack.c.l.b16 %v584
    %v1609 = vunpack.c.l.b16 %v585
    %v1610 = vunpack.c.l.b16 %v586
    %v1611 = vunpack.c.l.b16 %v587
    %v1612 = vunpack.c.l.b16 %v588
    %v1613 = vunpack.c.l.b16 %v589
    %v1614 = vunpack.c.l.b16 %v590
    %v1615 = vunpack.c.l.b16 %v591
    %v1616 = vunpack.c.l.b16 %v592
    %v1617 = vunpack.c.l.b16 %v593
    %v1618 = vunpack.c.l.b16 %v594
    %v1619 = vunpack.c.l.b16 %v595
    %v1620 = vunpack.c.l.b16 %v596
    %v1621 = vunpack.c.l.b16 %v597
    %v1622 = vunpack.c.l.b16 %v598
    %v1623 = vunpack.c.l.b16 %v599
    %v1624 = vunpack.c.l.b16 %v600
    %v1625 = vunpack.c.l.b16 %v601
    %v1626 = vunpack.c.l.b16 %v602
    %v1627 = vunpack.c.l.b16 %v603
    %v1628 = vunpack.c.l.b16 %v604
    %v1629 = vunpack.c.l.b16 %v605
    %v1630 = vunpack.c.l.b16 %v606
    %v1631 = vunpack.c.l.b16 %v607
    %v1632 = vunpack.c.l.b16 %v608
    %v1633 = vunpack.c.l.b16 %v609
    %v1634 = vunpack.c.l.b16 %v610
    %v1635 = vunpack.c.l.b16 %v611
    %v1636 = vunpack.c.l.b16 %v612
    %v1637 = vunpack.c.l.b16 %v613
    %v1638 = vunpack.c.l.b16 %v614
    %v1639 = vunpack.c.l.b16 %v615
    %v1640 = vunpack.c.l.b16 %v616
    %v1641 = vunpack.c.l.b16 %v617
    %v1642 = vunpack.c.l.b16 %v618
    %v1643 = vunpack.c.l.b16 %v619
    %v1644 = vunpack.c.l.b16 %v620
    %v1645 = vunpack.c.l.b16 %v621
    %v1646 = vunpack.c.l.b16 %v622
    %v1647 = vunpack.c.l.b16 %v623
    %v1648 = vunpack.c.l.b16 %v624
    %v1649 = vunpack.c.l.b16 %v625
    %v1650 = vunpack.c.l.b16 %v626
    %v1651 = vunpack.c.l.b16 %v627
    %v1652 = vunpack.c.l.b16 %v628
    %v1653 = vunpack.c.l.b16 %v629
    %v1654 = vunpack.c.l.b16 %v630
    %v1655 = vunpack.c.l.b16 %v631
    %v1656 = vunpack.c.l.b16 %v632
    %v1657 = vunpack.c.l.b16 %v633
    %v1658 = vunpack.c.l.b16 %v634
    %v1659 = vunpack.c.l.b16 %v635
    %v1660 = vunpack.c.l.b16 %v636
    %v1661 = vunpack.c.l.b16 %v637
    %v1662 = vunpack.c.l.b16 %v638
    %v1663 = vunpack.c.l.b16 %v639
    %v1664 = vunpack.c.l.b16 %v640
    %v1665 = vunpack.c.l.b16 %v641
    %v1666 = vunpack.c.l.b16 %v642
    %v1667 = vunpack.c.l.b16 %v643
    %v1668 = vunpack.c.l.b16 %v644
    %v1669 = vunpack.c.l.b16 %v645
    %v1670 = vunpack.c.l.b16 %v646
    %v1671 = vunpack.c.l.b16 %v647
    %v1672 = vunpack.c.l.b16 %v648
    %v1673 = vunpack.c.l.b16 %v649
    %v1674 = vunpack.c.l.b16 %v650
    %v1675 = vunpack.c.l.b16 %v651
    %v1676 = vunpack.c.l.b16 %v652
    %v1677 = vunpack.c.l.b16 %v653
    %v1678 = vunpack.c.l.b16 %v654
    %v1679 = vunpack.c.l.b16 %v655
    %v1680 = vunpack.c.l.b16 %v656
    %v1681 = vunpack.c.l.b16 %v657
    %v1682 = vunpack.c.l.b16 %v658
    %v1683 = vunpack.c.l.b16 %v659
    %v1684 = vunpack.c.l.b16 %v660
    %v1685 = vunpack.c.l.b16 %v661
    %v1686 = vunpack.c.l.b16 %v662
    %v1687 = vunpack.c.l.b16 %v663
    %v1688 = vunpack.c.l.b16 %v664
    %v1689 = vunpack.c.l.b16 %v665
    %v1690 = vunpack.c.l.b16 %v666
    %v1691 = vunpack.c.l.b16 %v667
    %v1692 = vunpack.c.l.b16 %v668
    %v1693 = vunpack.c.l.b16 %v669
    %v1694 = vunpack.c.l.b16 %v670
    %v1695 = vunpack.c.l.b16 %v671
    %v1696 = vunpack.c.l.b16 %v672
    %v1697 = vunpack.c.l.b16 %v673
    %v1698 = vunpack.c.l.b16 %v674
    %v1699 = vunpack.c.l.b16 %v675
    %v1700 = vunpack.c.l.b16 %v676
    %v1701 = vunpack.c.l.b16 %v677
    %v1702 = vunpack.c.l.b16 %v678
    %v1703 = vunpack.c.l.b16 %v679
    %v1704 = vunpack.c.l.b16 %v680
    %v1705 = vunpack.c.l.b16 %v681
    %v1706 = vunpack.c.l.b16 %v682
    %v1707 = vunpack.c.l.b16 %v683
    %v1708 = vunpack.c.l.b16 %v684
    %v1709 = vunpack.c.l.b16 %v685
    %v1710 = vunpack.c.l.b16 %v686
    %v1711 = vunpack.c.l.b16 %v687
    %v1712 = vunpack.c.l.b16 %v688
    %v1713 = vunpack.c.l.b16 %v689
    %v1714 = vunpack.c.l.b16 %v690
    %v1715 = vunpack.c.l.b16 %v691
    %v1716 = vunpack.c.l.b16 %v692
    %v1717 = vunpack.c.l.b16 %v693
    %v1718 = vunpack.c.l.b16 %v694
    %v1719 = vunpack.c.l.b16 %v695
    %v1720 = vunpack.c.l.b16 %v696
    %v1721 = vunpack.c.l.b16 %v697
    %v1722 = vunpack.c.l.b16 %v698
    %v1723 = vunpack.c.l.b16 %v699
    %v1724 = vunpack.c.l.b16 %v700
    %v1725 = vunpack.c.l.b16 %v701
    %v1726 = vunpack.c.l.b16 %v702
    %v1727 = vunpack.c.l.b16 %v703
    %v1728 = vunpack.c.l.b16 %v704
    %v1729 = vunpack.c.l.b16 %v705
    %v1730 = vunpack.c.l.b16 %v706
    %v1731 = vunpack.c.l.b16 %v707
    %v1732 = vunpack.c.l.b16 %v708
    %v1733 = vunpack.c.l.b16 %v709
    %v1734 = vunpack.c.l.b16 %v710
    %v1735 = vunpack.c.l.b16 %v711
    %v1736 = vunpack.c.l.b16 %v712
    %v1737 = vunpack.c.l.b16 %v713
    %v1738 = vunpack.c.l.b16 %v714
    %v1739 = vunpack.c.l.b16 %v715
    %v1740 = vunpack.c.l.b16 %v716
    %v1741 = vunpack.c.l.b16 %v717
    %v1742 = vunpack.c.l.b16 %v718
    %v1743 = vunpack.c.l.b16 %v719
    %v1744 = vunpack.c.l.b16 %v720
    %v1745 = vunpack.c.l.b16 %v721
    %v1746 = vunpack.c.l.b16 %v722
    %v1747 = vunpack.c.l.b16 %v723
    %v1748 = vunpack.c.l.b16 %v724
    %v1749 = vunpack.c.l.b16 %v725
    %v1750 = vunpack.c.l.b16 %v726
    %v1751 = vunpack.c.l.b16 %v727
    %v1752 = vunpack.c.l.b16 %v728
    %v1753 = vunpack.c.l.b16 %v729
    %v1754 = vunpack.c.l.b16 %v730
    %v1755 = vunpack.c.l.b16 %v731
    %v1756 = vunpack.c.l.b16 %v732
    %v1757 = vunpack.c.l.b16 %v733
    %v1758 = vunpack.c.l.b16 %v734
    %v1759 = vunpack.c.l.b16 %v735
    %v1760 = vunpack.c.l.b16 %v736
    %v1761 = vunpack.c.l.b16 %v737
    %v1762 = vunpack.c.l.b16 %v738
    %v1763 = vunpack.c.l.b16 %v739
    %v1764 = vunpack.c.l.b16 %v740
    %v1765 = vunpack.c.l.b16 %v741
    %v1766 = vunpack.c.l.b16 %v742
    %v1767 = vunpack.c.l.b16 %v743
    %v1768 = vunpack.c.l.b16 %v744
    %v1769 = vunpack.c.l.b16 %v745
    %v1770 = vunpack.c.l.b16 %v746
    %v1771 = vunpack.c.l.b16 %v747
    %v1772 = vunpack.c.l.b16 %v748
    %v1773 = vunpack.c.l.b16 %v749
    %v1774 = vunpack.c.l.b16 %v750
    %v1775 = vunpack.c.l.b16 %v751
    %v1776 = vunpack.c.l.b16 %v752
    %v1777 = vunpack.c.l.b16 %v753
    %v1778 = vunpack.c.l.b16 %v754
    %v1779 = vunpack.c.l.b16 %v755
    %v1780 = vunpack.c.l.b16 %v756
    %v1781 = vunpack.c.l.b16 %v757
    %v1782 = vunpack.c.l.b16 %v758
    %v1783 = vunpack.c.l.b16 %v759
    %v1784 = vunpack.c.l.b16 %v760
    %v1785 = vunpack.c.l.b16 %v761
    %v1786 = vunpack.c.l.b16 %v762
    %v1787 = vunpack.c.l.b16 %v763
    %v1788 = vunpack.c.l.b16 %v764
    %v1789 = vunpack.c.l.b16 %v765
    %v1790 = vunpack.c.l.b16 %v766
    %v1791 = vunpack.c.l.b16 %v767
    %v1792 = vunpack.c.l.b16 %v768
    %v1793 = vunpack.c.l.b16 %v769
    %v1794 = vunpack.c.l.b16 %v770
    %v1795 = vunpack.c.l.b16 %v771
    %v1796 = vunpack.c.l.b16 %v772
    %v1797 = vunpack.c.l.b16 %v773
    %v1798 = vunpack.c.l.b16 %v774
    %v1799 = vunpack.c.l.b16 %v775
    %v1800 = vunpack.c.l.b16 %v776
    %v1801 = vunpack.c.l.b16 %v777
    %v1802 = vunpack.c.l.b16 %v778
    %v1803 = vunpack.c.l.b16 %v779
    %v1804 = vunpack.c.l.b16 %v780
    %v1805 = vunpack.c.l.b16 %v781
    %v1806 = vunpack.c.l.b16 %v782
    %v1807 = vunpack.c.l.b16 %v783
    %v1808 = vunpack.c.l.b16 %v784
    %v1809 = vunpack.c.l.b16 %v785
    %v1810 = vunpack.c.l.b16 %v786
    %v1811 = vunpack.c.l.b16 %v787
    %v1812 = vunpack.c.l.b16 %v788
    %v1813 = vunpack.c.l.b16 %v789
    %v1814 = vunpack.c.l.b16 %v790
    %v1815 = vunpack.c.l.b16 %v791
    %v1816 = vunpack.c.l.b16 %v792
    %v1817 = vunpack.c.l.b16 %v793
    %v1818 = vunpack.c.l.b16 %v794
    %v1819 = vunpack.c.l.b16 %v795
    %v1820 = vunpack.c.l.b16 %v796
    %v1821 = vunpack.c.l.b16 %v797
    %v1822 = vunpack.c.l.b16 %v798
    %v1823 = vunpack.c.l.b16 %v799
    %v1824 = vunpack.c.l.b16 %v800
    %v1825 = vunpack.c.l.b16 %v801
    %v1826 = vunpack.c.l.b16 %v802
    %v1827 = vunpack.c.l.b16 %v803
    %v1828 = vunpack.c.l.b16 %v804
    %v1829 = vunpack.c.l.b16 %v805
    %v1830 = vunpack.c.l.b16 %v806
    %v1831 = vunpack.c.l.b16 %v807
    %v1832 = vunpack.c.l.b16 %v808
    %v1833 = vunpack.c.l.b16 %v809
    %v1834 = vunpack.c.l.b16 %v810
    %v1835 = vunpack.c.l.b16 %v811
    %v1836 = vunpack.c.l.b16 %v812
    %v1837 = vunpack.c.l.b16 %v813
    %v1838 = vunpack.c.l.b16 %v814
    %v1839 = vunpack.c.l.b16 %v815
    %v1840 = vunpack.c.l.b16 %v816
    %v1841 = vunpack.c.l.b16 %v817
    %v1842 = vunpack.c.l.b16 %v818
    %v1843 = vunpack.c.l.b16 %v819
    %v1844 = vunpack.c.l.b16 %v820
    %v1845 = vunpack.c.l.b16 %v821
    %v1846 = vunpack.c.l.b16 %v822
    %v1847 = vunpack.c.l.b16 %v823
    %v1848 = vunpack.c.l.b16 %v824
    %v1849 = vunpack.c.l.b16 %v825
    %v1850 = vunpack.c.l.b16 %v826
    %v1851 = vunpack.c.l.b16 %v827
    %v1852 = vunpack.c.l.b16 %v828
    %v1853 = vunpack.c.l.b16 %v829
    %v1854 = vunpack.c.l.b16 %v830
    %v1855 = vunpack.c.l.b16 %v831
    %v1856 = vunpack.c.l.b16 %v832
    %v1857 = vunpack.c.l.b16 %v833
    %v1858 = vunpack.c.l.b16 %v834
    %v1859 = vunpack.c.l.b16 %v835
    %v1860 = vunpack.c.l.b16 %v836
    %v1861 = vunpack.c.l.b16 %v837
    %v1862 = vunpack.c.l.b16 %v838
    %v1863 = vunpack.c.l.b16 %v839
    %v1864 = vunpack.c.l.b16 %v840
    %v1865 = vunpack.c.l.b16 %v841
    %v1866 = vunpack.c.l.b16 %v842
    %v1867 = vunpack.c.l.b16 %v843
    %v1868 = vunpack.c.l.b16 %v844
    %v1869 = vunpack.c.l.b16 %v845
    %v1870 = vunpack.c.l.b16 %v846
    %v1871 = vunpack.c.l.b16 %v847
    %v1872 = vunpack.c.l.b16 %v848
    %v1873 = vunpack.c.l.b16 %v849
    %v1874 = vunpack.c.l.b16 %v850
    %v1875 = vunpack.c.l.b16 %v851
    %v1876 = vunpack.c.l.b16 %v852
    %v1877 = vunpack.c.l.b16 %v853
    %v1878 = vunpack.c.l.b16 %v854
    %v1879 = vunpack.c.l.b16 %v855
    %v1880 = vunpack.c.l.b16 %v856
    %v1881 = vunpack.c.l.b16 %v857
    %v1882 = vunpack.c.l.b16 %v858
    %v1883 = vunpack.c.l.b16 %v859
    %v1884 = vunpack.c.l.b16 %v860
    %v1885 = vunpack.c.l.b16 %v861
    %v1886 = vunpack.c.l.b16 %v862
    %v1887 = vunpack.c.l.b16 %v863
    %v1888 = vunpack.c.l.b16 %v864
    %v1889 = vunpack.c.l.b16 %v865
    %v1890 = vunpack.c.l.b16 %v866
    %v1891 = vunpack.c.l.b16 %v867
    %v1892 = vunpack.c.l.b16 %v868
    %v1893 = vunpack.c.l.b16 %v869
    %v1894 = vunpack.c.l.b16 %v870
    %v1895 = vunpack.c.l.b16 %v871
    %v1896 = vunpack.c.l.b16 %v872
    %v1897 = vunpack.c.l.b16 %v873
    %v1898 = vunpack.c.l.b16 %v874
    %v1899 = vunpack.c.l.b16 %v875
    %v1900 = vunpack.c.l.b16 %v876
    %v1901 = vunpack.c.l.b16 %v877
    %v1902 = vunpack.c.l.b16 %v878
    %v1903 = vunpack.c.l.b16 %v879
    %v1904 = vunpack.c.l.b16 %v880
    %v1905 = vunpack.c.l.b16 %v881
    %v1906 = vunpack.c.l.b16 %v882
    %v1907 = vunpack.c.l.b16 %v883
    %v1908 = vunpack.c.l.b16 %v884
    %v1909 = vunpack.c.l.b16 %v885
    %v1910 = vunpack.c.l.b16 %v886
    %v1911 = vunpack.c.l.b16 %v887
    %v1912 = vunpack.c.l.b16 %v888
    %v1913 = vunpack.c.l.b16 %v889
    %v1914 = vunpack.c.l.b16 %v890
    %v1915 = vunpack.c.l.b16 %v891
    %v1916 = vunpack.c.l.b16 %v892
    %v1917 = vunpack.c.l.b16 %v893
    %v1918 = vunpack.c.l.b16 %v894
    %v1919 = vunpack.c.l.b16 %v895
    %v1920 = vunpack.c.l.b16 %v896
    %v1921 = vunpack.c.l.b16 %v897
    %v1922 = vunpack.c.l.b16 %v898
    %v1923 = vunpack.c.l.b16 %v899
    %v1924 = vunpack.c.l.b16 %v900
    %v1925 = vunpack.c.l.b16 %v901
    %v1926 = vunpack.c.l.b16 %v902
    %v1927 = vunpack.c.l.b16 %v903
    %v1928 = vunpack.c.l.b16 %v904
    %v1929 = vunpack.c.l.b16 %v905
    %v1930 = vunpack.c.l.b16 %v906
    %v1931 = vunpack.c.l.b16 %v907
    %v1932 = vunpack.c.l.b16 %v908
    %v1933 = vunpack.c.l.b16 %v909
    %v1934 = vunpack.c.l.b16 %v910
    %v1935 = vunpack.c.l.b16 %v911
    %v1936 = vunpack.c.l.b16 %v912
    %v1937 = vunpack.c.l.b16 %v913
    %v1938 = vunpack.c.l.b16 %v914
    %v1939 = vunpack.c.l.b16 %v915
    %v1940 = vunpack.c.l.b16 %v916
    %v1941 = vunpack.c.l.b16 %v917
    %v1942 = vunpack.c.l.b16 %v918
    %v1943 = vunpack.c.l.b16 %v919
    %v1944 = vunpack.c.l.b16 %v920
    %v1945 = vunpack.c.l.b16 %v921
    %v1946 = vunpack.c.l.b16 %v922
    %v1947 = vunpack.c.l.b16 %v923
    %v1948 = vunpack.c.l.b16 %v924
    %v1949 = vunpack.c.l.b16 %v925
    %v1950 = vunpack.c.l.b16 %v926
    %v1951 = vunpack.c.l.b16 %v927
    %v1952 = vunpack.c.l.b16 %v928
    %v1953 = vunpack.c.l.b16 %v929
    %v1954 = vunpack.c.l.b16 %v930
    %v1955 = vunpack.c.l.b16 %v931
    %v1956 = vunpack.c.l.b16 %v932
    %v1957 = vunpack.c.l.b16 %v933
    %v1958 = vunpack.c.l.b16 %v934
    %v1959 = vunpack.c.l.b16 %v935
    %v1960 = vunpack.c.l.b16 %v936
    %v1961 = vunpack.c.l.b16 %v937
    %v1962 = vunpack.c.l.b16 %v938
    %v1963 = vunpack.c.l.b16 %v939
    %v1964 = vunpack.c.l.b16 %v940
    %v1965 = vunpack.c.l.b16 %v941
    %v1966 = vunpack.c.l.b16 %v942
    %v1967 = vunpack.c.l.b16 %v943
    %v1968 = vunpack.c.l.b16 %v944
    %v1969 = vunpack.c.l.b16 %v945
    %v1970 = vunpack.c.l.b16 %v946
    %v1971 = vunpack.c.l.b16 %v947
    %v1972 = vunpack.c.l.b16 %v948
    %v1973 = vunpack.c.l.b16 %v949
    %v1974 = vunpack.c.l.b16 %v950
    %v1975 = vunpack.c.l.b16 %v951
    %v1976 = vunpack.c.l.b16 %v952
    %v1977 = vunpack.c.l.b16 %v953
    %v1978 = vunpack.c.l.b16 %v954
    %v1979 = vunpack.c.l.b16 %v955
    %v1980 = vunpack.c.l.b16 %v956
    %v1981 = vunpack.c.l.b16 %v957
    %v1982 = vunpack.c.l.b16 %v958
    %v1983 = vunpack.c.l.b16 %v959
    %v1984 = vunpack.c.l.b16 %v960
    %v1985 = vunpack.c.l.b16 %v961
    %v1986 = vunpack.c.l.b16 %v962
    %v1987 = vunpack.c.l.b16 %v963
    %v1988 = vunpack.c.l.b16 %v964
    %v1989 = vunpack.c.l.b16 %v965
    %v1990 = vunpack.c.l.b16 %v966
    %v1991 = vunpack.c.l.b16 %v967
    %v1992 = vunpack.c.l.b16 %v968
    %v1993 = vunpack.c.l.b16 %v969
    %v1994 = vunpack.c.l.b16 %v970
    %v1995 = vunpack.c.l.b16 %v971
    %v1996 = vunpack.c.l.b16 %v972
    %v1997 = vunpack.c.l.b16 %v973
    %v1998 = vunpack.c.l.b16 %v974
    %v1999 = vunpack.c.l.b16 %v975
    %v2000 = vunpack.c.l.b16 %v976
    %v2001 = vunpack.c.l.b16 %v977
    %v2002 = vunpack.c.l.b16 %v978
    %v2003 = vunpack.c.l.b16 %v979
    %v2004 = vunpack.c.l.b16 %v980
    %v2005 = vunpack.c.l.b16 %v981
    %v2006 = vunpack.c.l.b16 %v982
    %v2007 = vunpack.c.l.b16 %v983
    %v2008 = vunpack.c.l.b16 %v984
    %v2009 = vunpack.c.l.b16 %v985
    %v2010 = vunpack.c.l.b16 %v986
    %v2011 = vunpack.c.l.b16 %v987
    %v2012 = vunpack.c.l.b16 %v988
    %v2013 = vunpack.c.l.b16 %v989
    %v2014 = vunpack.c.l.b16 %v990
    %v2015 = vunpack.c.l.b16 %v991
    %v2016 = vunpack.c.l.b16 %v992
    %v2017 = vunpack.c.l.b16 %v993
    %v2018 = vunpack.c.l.b16 %v994
    %v2019 = vunpack.c.l.b16 %v995
    %v2020 = vunpack.c.l.b16 %v996
    %v2021 = vunpack.c.l.b16 %v997
    %v2022 = vunpack.c.l.b16 %v998
    %v2023 = vunpack.c.l.b16 %v999
    %v2024 = vunpack.c.l.b16 %v1000
    %v2025 = vunpack.c.l.b16 %v1001
    %v2026 = vunpack.c.l.b16 %v1002
    %v2027 = vunpack.c.l.b16 %v1003
    %v2028 = vunpack.c.l.b16 %v1004
    %v2029 = vunpack.c.l.b16 %v1005
    %v2030 = vunpack.c.l.b16 %v1006
    %v2031 = vunpack.c.l.b16 %v1007
    %v2032 = vunpack.c.l.b16 %v1008
    %v2033 = vunpack.c.l.b16 %v1009
    %v2034 = vunpack.c.l.b16 %v1010
    %v2035 = vunpack.c.l.b16 %v1011
    %v2036 = vunpack.c.l.b16 %v1012
    %v2037 = vunpack.c.l.b16 %v1013
    %v2038 = vunpack.c.l.b16 %v1014
    %v2039 = vunpack.c.l.b16 %v1015
    %v2040 = vunpack.c.l.b16 %v1016
    %v2041 = vunpack.c.l.b16 %v1017
    %v2042 = vunpack.c.l.b16 %v1018
    %v2043 = vunpack.c.l.b16 %v1019
    %v2044 = vunpack.c.l.b16 %v1020
    %v2045 = vunpack.c.l.b16 %v1021
    %v2046 = vunpack.c.l.b16 %v1022
    %v2047 = vunpack.c.l.b16 %v1023
    %v2048 = vunpack.c.l.b16 %v1024
    %v2049 = vunpack.c.l.b16 %v1025
    %v2050 = vunpack.c.l.b16 %v1026
    %v2051 = vunpack.c.l.b16 %v1027
    %v2052 = vunpack.c.l.b16 %v1028
    %v2053 = vunpack.c.l.b16 %v1029
    %v2054 = vunpack.c.l.b16 %v1030
    %v2055 = vunpack.c.l.b16 %v1031
    %v2056 = vunpack.c.l.b16 %v1032
    %v2057 = vunpack.c.l.b16 %v1033
    %v2058 = vunpack.c.l.b16 %v1034
    %v2059 = vunpack.c.l.b16 %v1035
    %v2060 = vpack.c.b16 %v1549, %v1548
    %v2061 = vpack.c.b16 %v1551, %v1550
    %v2062 = vpack.c.b16 %v1553, %v1552
    %v2063 = vpack.c.b16 %v1555, %v1554
    %v2064 = vpack.c.b16 %v1557, %v1556
    %v2065 = vpack.c.b16 %v1559, %v1558
    %v2066 = vpack.c.b16 %v1561, %v1560
    %v2067 = vpack.c.b16 %v1563, %v1562
    %v2068 = vpack.c.b16 %v1565, %v1564
    %v2069 = vpack.c.b16 %v1567, %v1566
    %v2070 = vpack.c.b16 %v1569, %v1568
    %v2071 = vpack.c.b16 %v1571, %v1570
    %v2072 = vpack.c.b16 %v1573, %v1572
    %v2073 = vpack.c.b16 %v1575, %v1574
    %v2074 = vpack.c.b16 %v1577, %v1576
    %v2075 = vpack.c.b16 %v1579, %v1578
    %v2076 = vpack.c.b16 %v1581, %v1580
    %v2077 = vpack.c.b16 %v1583, %v1582
    %v2078 = vpack.c.b16 %v1585, %v1584
    %v2079 = vpack.c.b16 %v1587, %v1586
    %v2080 = vpack.c.b16 %v1589, %v1588
    %v2081 = vpack.c.b16 %v1591, %v1590
    %v2082 = vpack.c.b16 %v1593, %v1592
    %v2083 = vpack.c.b16 %v1595, %v1594
    %v2084 = vpack.c.b16 %v1597, %v1596
    %v2085 = vpack.c.b16 %v1599, %v1598
    %v2086 = vpack.c.b16 %v1601, %v1600
    %v2087 = vpack.c.b16 %v1603, %v1602
    %v2088 = vpack.c.b16 %v1605, %v1604
    %v2089 = vpack.c.b16 %v1607, %v1606
    %v2090 = vpack.c.b16 %v1609, %v1608
    %v2091 = vpack.c.b16 %v1611, %v1610
    %v2092 = vpack.c.b16 %v1613, %v1612
    %v2093 = vpack.c.b16 %v1615, %v1614
    %v2094 = vpack.c.b16 %v1617, %v1616
    %v2095 = vpack.c.b16 %v1619, %v1618
    %v2096 = vpack.c.b16 %v1621, %v1620
    %v2097 = vpack.c.b16 %v1623, %v1622
    %v2098 = vpack.c.b16 %v1625, %v1624
    %v2099 = vpack.c.b16 %v1627, %v1626
    %v2100 = vpack.c.b16 %v1629, %v1628
    %v2101 = vpack.c.b16 %v1631, %v1630
    %v2102 = vpack.c.b16 %v1633, %v1632
    %v2103 = vpack.c.b16 %v1635, %v1634
    %v2104 = vpack.c.b16 %v1637, %v1636
    %v2105 = vpack.c.b16 %v1639, %v1638
    %v2106 = vpack.c.b16 %v1641, %v1640
    %v2107 = vpack.c.b16 %v1643, %v1642
    %v2108 = vpack.c.b16 %v1645, %v1644
    %v2109 = vpack.c.b16 %v1647, %v1646
    %v2110 = vpack.c.b16 %v1649, %v1648
    %v2111 = vpack.c.b16 %v1651, %v1650
    %v2112 = vpack.c.b16 %v1653, %v1652
    %v2113 = vpack.c.b16 %v1655, %v1654
    %v2114 = vpack.c.b16 %v1657, %v1656
    %v2115 = vpack.c.b16 %v1659, %v1658
    %v2116 = vpack.c.b16 %v1661, %v1660
    %v2117 = vpack.c.b16 %v1663, %v1662
    %v2118 = vpack.c.b16 %v1665, %v1664
    %v2119 = vpack.c.b16 %v1667, %v1666
    %v2120 = vpack.c.b16 %v1669, %v1668
    %v2121 = vpack.c.b16 %v1671, %v1670
    %v2122 = vpack.c.b16 %v1673, %v1672
    %v2123 = vpack.c.b16 %v1675, %v1674
    %v2124 = vpack.c.b16 %v1677, %v1676
    %v2125 = vpack.c.b16 %v1679, %v1678
    %v2126 = vpack.c.b16 %v1681, %v1680
    %v2127 = vpack.c.b16 %v1683, %v1682
    %v2128 = vpack.c.b16 %v1685, %v1684
    %v2129 = vpack.c.b16 %v1687, %v1686
    %v2130 = vpack.c.b16 %v1689, %v1688
    %v2131 = vpack.c.b16 %v1691, %v1690
    %v2132 = vpack.c.b16 %v1693, %v1692
    %v2133 = vpack.c.b16 %v1695, %v1694
    %v2134 = vpack.c.b16 %v1697, %v1696
    %v2135 = vpack.c.b16 %v1699, %v1698
    %v2136 = vpack.c.b16 %v1701, %v1700
    %v2137 = vpack.c.b16 %v1703, %v1702
    %v2138 = vpack.c.b16 %v1705, %v1704
    %v2139 = vpack.c.b16 %v1707, %v1706
    %v2140 = vpack.c.b16 %v1709, %v1708
    %v2141 = vpack.c.b16 %v1711, %v1710
    %v2142 = vpack.c.b16 %v1713, %v1712
    %v2143 = vpack.c.b16 %v1715, %v1714
    %v2144 = vpack.c.b16 %v1717, %v1716
    %v2145 = vpack.c.b16 %v1719, %v1718
    %v2146 = vpack.c.b16 %v1721, %v1720
    %v2147 = vpack.c.b16 %v1723, %v1722
    %v2148 = vpack.c.b16 %v1725, %v1724
    %v2149 = vpack.c.b16 %v1727, %v1726
    %v2150 = vpack.c.b16 %v1729, %v1728
    %v2151 = vpack.c.b16 %v1731, %v1730
    %v2152 = vpack.c.b16 %v1733, %v1732
    %v2153 = vpack.c.b16 %v1735, %v1734
    %v2154 = vpack.c.b16 %v1737, %v1736
    %v2155 = vpack.c.b16 %v1739, %v1738
    %v2156 = vpack.c.b16 %v1741, %v1740
    %v2157 = vpack.c.b16 %v1743, %v1742
    %v2158 = vpack.c.b16 %v1745, %v1744
    %v2159 = vpack.c.b16 %v1747, %v1746
    %v2160 = vpack.c.b16 %v1749, %v1748
    %v2161 = vpack.c.b16 %v1751, %v1750
    %v2162 = vpack.c.b16 %v1753, %v1752
    %v2163 = vpack.c.b16 %v1755, %v1754
    %v2164 = vpack.c.b16 %v1757, %v1756
    %v2165 = vpack.c.b16 %v1759, %v1758
    %v2166 = vpack.c.b16 %v1761, %v1760
    %v2167 = vpack.c.b16 %v1763, %v1762
    %v2168 = vpack.c.b16 %v1765, %v1764
    %v2169 = vpack.c.b16 %v1767, %v1766
    %v2170 = vpack.c.b16 %v1769, %v1768
    %v2171 = vpack.c.b16 %v1771, %v1770
    %v2172 = vpack.c.b16 %v1773, %v1772
    %v2173 = vpack.c.b16 %v1775, %v1774
    %v2174 = vpack.c.b16 %v1777, %v1776
    %v2175 = vpack.c.b16 %v1779, %v1778
    %v2176 = vpack.c.b16 %v1781, %v1780
    %v2177 = vpack.c.b16 %v1783, %v1782
    %v2178 = vpack.c.b16 %v1785, %v1784
    %v2179 = vpack.c.b16 %v1787, %v1786
    %v2180 = vpack.c.b16 %v1789, %v1788
    %v2181 = vpack.c.b16 %v1791, %v1790
    %v2182 = vpack.c.b16 %v1793, %v1792
    %v2183 = vpack.c.b16 %v1795, %v1794
    %v2184 = vpack.c.b16 %v1797, %v1796
    %v2185 = vpack.c.b16 %v1799, %v1798
    %v2186 = vpack.c.b16 %v1801, %v1800
    %v2187 = vpack.c.b16 %v1803, %v1802
    %v2188 = vpack.c.b16 %v1805, %v1804
    %v2189 = vpack.c.b16 %v1807, %v1806
    %v2190 = vpack.c.b16 %v1809, %v1808
    %v2191 = vpack.c.b16 %v1811, %v1810
    %v2192 = vpack.c.b16 %v1813, %v1812
    %v2193 = vpack.c.b16 %v1815, %v1814
    %v2194 = vpack.c.b16 %v1817, %v1816
    %v2195 = vpack.c.b16 %v1819, %v1818
    %v2196 = vpack.c.b16 %v1821, %v1820
    %v2197 = vpack.c.b16 %v1823, %v1822
    %v2198 = vpack.c.b16 %v1825, %v1824
    %v2199 = vpack.c.b16 %v1827, %v1826
    %v2200 = vpack.c.b16 %v1829, %v1828
    %v2201 = vpack.c.b16 %v1831, %v1830
    %v2202 = vpack.c.b16 %v1833, %v1832
    %v2203 = vpack.c.b16 %v1835, %v1834
    %v2204 = vpack.c.b16 %v1837, %v1836
    %v2205 = vpack.c.b16 %v1839, %v1838
    %v2206 = vpack.c.b16 %v1841, %v1840
    %v2207 = vpack.c.b16 %v1843, %v1842
    %v2208 = vpack.c.b16 %v1845, %v1844
    %v2209 = vpack.c.b16 %v1847, %v1846
    %v2210 = vpack.c.b16 %v1849, %v1848
    %v2211 = vpack.c.b16 %v1851, %v1850
    %v2212 = vpack.c.b16 %v1853, %v1852
    %v2213 = vpack.c.b16 %v1855, %v1854
    %v2214 = vpack.c.b16 %v1857, %v1856
    %v2215 = vpack.c.b16 %v1859, %v1858
    %v2216 = vpack.c.b16 %v1861, %v1860
    %v2217 = vpack.c.b16 %v1863, %v1862
    %v2218 = vpack.c.b16 %v1865, %v1864
    %v2219 = vpack.c.b16 %v1867, %v1866
    %v2220 = vpack.c.b16 %v1869, %v1868
    %v2221 = vpack.c.b16 %v1871, %v1870
    %v2222 = vpack.c.b16 %v1873, %v1872
    %v2223 = vpack.c.b16 %v1875, %v1874
    %v2224 = vpack.c.b16 %v1877, %v1876
    %v2225 = vpack.c.b16 %v1879, %v1878
    %v2226 = vpack.c.b16 %v1881, %v1880
    %v2227 = vpack.c.b16 %v1883, %v1882
    %v2228 = vpack.c.b16 %v1885, %v1884
    %v2229 = vpack.c.b16 %v1887, %v1886
    %v2230 = vpack.c.b16 %v1889, %v1888
    %v2231 = vpack.c.b16 %v1891, %v1890
    %v2232 = vpack.c.b16 %v1893, %v1892
    %v2233 = vpack.c.b16 %v1895, %v1894
    %v2234 = vpack.c.b16 %v1897, %v1896
    %v2235 = vpack.c.b16 %v1899, %v1898
    %v2236 = vpack.c.b16 %v1901, %v1900
    %v2237 = vpack.c.b16 %v1903, %v1902
    %v2238 = vpack.c.b16 %v1905, %v1904
    %v2239 = vpack.c.b16 %v1907, %v1906
    %v2240 = vpack.c.b16 %v1909, %v1908
    %v2241 = vpack.c.b16 %v1911, %v1910
    %v2242 = vpack.c.b16 %v1913, %v1912
    %v2243 = vpack.c.b16 %v1915, %v1914
    %v2244 = vpack.c.b16 %v1917, %v1916
    %v2245 = vpack.c.b16 %v1919, %v1918
    %v2246 = vpack.c.b16 %v1921, %v1920
    %v2247 = vpack.c.b16 %v1923, %v1922
    %v2248 = vpack.c.b16 %v1925, %v1924
    %v2249 = vpack.c.b16 %v1927, %v1926
    %v2250 = vpack.c.b16 %v1929, %v1928
    %v2251 = vpack.c.b16 %v1931, %v1930
    %v2252 = vpack.c.b16 %v1933, %v1932
    %v2253 = vpack.c.b16 %v1935, %v1934
    %v2254 = vpack.c.b16 %v1937, %v1936
    %v2255 = vpack.c.b16 %v1939, %v1938
    %v2256 = vpack.c.b16 %v1941, %v1940
    %v2257 = vpack.c.b16 %v1943, %v1942
    %v2258 = vpack.c.b16 %v1945, %v1944
    %v2259 = vpack.c.b16 %v1947, %v1946
    %v2260 = vpack.c.b16 %v1949, %v1948
    %v2261 = vpack.c.b16 %v1951, %v1950
    %v2262 = vpack.c.b16 %v1953, %v1952
    %v2263 = vpack.c.b16 %v1955, %v1954
    %v2264 = vpack.c.b16 %v1957, %v1956
    %v2265 = vpack.c.b16 %v1959, %v1958
    %v2266 = vpack.c.b16 %v1961, %v1960
    %v2267 = vpack.c.b16 %v1963, %v1962
    %v2268 = vpack.c.b16 %v1965, %v1964
    %v2269 = vpack.c.b16 %v1967, %v1966
    %v2270 = vpack.c.b16 %v1969, %v1968
    %v2271 = vpack.c.b16 %v1971, %v1970
    %v2272 = vpack.c.b16 %v1973, %v1972
    %v2273 = vpack.c.b16 %v1975, %v1974
    %v2274 = vpack.c.b16 %v1977, %v1976
    %v2275 = vpack.c.b16 %v1979, %v1978
    %v2276 = vpack.c.b16 %v1981, %v1980
    %v2277 = vpack.c.b16 %v1983, %v1982
    %v2278 = vpack.c.b16 %v1985, %v1984
    %v2279 = vpack.c.b16 %v1987, %v1986
    %v2280 = vpack.c.b16 %v1989, %v1988
    %v2281 = vpack.c.b16 %v1991, %v1990
    %v2282 = vpack.c.b16 %v1993, %v1992
    %v2283 = vpack.c.b16 %v1995, %v1994
    %v2284 = vpack.c.b16 %v1997, %v1996
    %v2285 = vpack.c.b16 %v1999, %v1998
    %v2286 = vpack.c.b16 %v2001, %v2000
    %v2287 = vpack.c.b16 %v2003, %v2002
    %v2288 = vpack.c.b16 %v2005, %v2004
    %v2289 = vpack.c.b16 %v2007, %v2006
    %v2290 = vpack.c.b16 %v2009, %v2008
    %v2291 = vpack.c.b16 %v2011, %v2010
    %v2292 = vpack.c.b16 %v2013, %v2012
    %v2293 = vpack.c.b16 %v2015, %v2014
    %v2294 = vpack.c.b16 %v2017, %v2016
    %v2295 = vpack.c.b16 %v2019, %v2018
    %v2296 = vpack.c.b16 %v2021, %v2020
    %v2297 = vpack.c.b16 %v2023, %v2022
    %v2298 = vpack.c.b16 %v2025, %v2024
    %v2299 = vpack.c.b16 %v2027, %v2026
    %v2300 = vpack.c.b16 %v2029, %v2028
    %v2301 = vpack.c.b16 %v2031, %v2030
    %v2302 = vpack.c.b16 %v2033, %v2032
    %v2303 = vpack.c.b16 %v2035, %v2034
    %v2304 = vpack.c.b16 %v2037, %v2036
    %v2305 = vpack.c.b16 %v2039, %v2038
    %v2306 = vpack.c.b16 %v2041, %v2040
    %v2307 = vpack.c.b16 %v2043, %v2042
    %v2308 = vpack.c.b16 %v2045, %v2044
    %v2309 = vpack.c.b16 %v2047, %v2046
    %v2310 = vpack.c.b16 %v2049, %v2048
    %v2311 = vpack.c.b16 %v2051, %v2050
    %v2312 = vpack.c.b16 %v2053, %v2052
    %v2313 = vpack.c.b16 %v2055, %v2054
    %v2314 = vpack.c.b16 %v2057, %v2056
    %v2315 = vpack.c.b16 %v2059, %v2058
    %2572 = vmatprep.subr.bf16.mxu0 0
    %2573 = vmatpush1.bf16.msra.mxu0 %v2060
    %2574 = vmatprep.subr.bf16.mxu0 0
    %2575 = vmatpush1.bf16.msra.mxu0 %v2061
    %2576 = vmatprep.subr.bf16.mxu0 0
    %2577 = vmatpush1.bf16.msra.mxu0 %v2062
    %2578 = vmatprep.subr.bf16.mxu0 0
    %2579 = vmatpush1.bf16.msra.mxu0 %v2063
    %2580 = vmatprep.subr.bf16.mxu0 0
    %2581 = vmatpush1.bf16.msra.mxu0 %v2064
    %2582 = vmatprep.subr.bf16.mxu0 0
    %2583 = vmatpush1.bf16.msra.mxu0 %v2065
    %2584 = vmatprep.subr.bf16.mxu0 0
    %2585 = vmatpush1.bf16.msra.mxu0 %v2066
    %2586 = vmatprep.subr.bf16.mxu0 0
    %2587 = vmatpush1.bf16.msra.mxu0 %v2067
    %2588 = vmatprep.subr.bf16.mxu0 0
    %2589 = vmatpush1.bf16.msra.mxu0 %v2068
    %2590 = vmatprep.subr.bf16.mxu0 0
    %2591 = vmatpush1.bf16.msra.mxu0 %v2069
    %2592 = vmatprep.subr.bf16.mxu0 0
    %2593 = vmatpush1.bf16.msra.mxu0 %v2070
    %2594 = vmatprep.subr.bf16.mxu0 0
    %2595 = vmatpush1.bf16.msra.mxu0 %v2071
    %2596 = vmatprep.subr.bf16.mxu0 0
    %2597 = vmatpush1.bf16.msra.mxu0 %v2072
    %2598 = vmatprep.subr.bf16.mxu0 0
    %2599 = vmatpush1.bf16.msra.mxu0 %v2073
    %2600 = vmatprep.subr.bf16.mxu0 0
    %2601 = vmatpush1.bf16.msra.mxu0 %v2074
    %2602 = vmatprep.subr.bf16.mxu0 0
    %2603 = vmatpush1.bf16.msra.mxu0 %v2075
    %2604 = vmatprep.mubr.bf16.mxu0 %v493
    %2605 = vmatmul.mubr.bf16.gmra.mrb[0].mxu0 %v492
    %v2606 = vpop.f32.mrb[0].mxu0
    %v2607 = vadd.f32 0.0, %v2606
    %v2608 = vpop.f32.mrb[0].mxu0
    %v2609 = vpop.f32.mrb[0].mxu0
    %v2610 = vpop.f32.mrb[0].mxu0
    %2611 = vdwg.mxu0
    %2612 = vmatprep.subr.bf16.mxu0 0
    %2613 = vmatpush1.bf16.msra.mxu0 %v2076
    %2614 = vmatprep.subr.bf16.mxu0 0
    %2615 = vmatpush1.bf16.msra.mxu0 %v2077
    %2616 = vmatprep.subr.bf16.mxu0 0
    %2617 = vmatpush1.bf16.msra.mxu0 %v2078
    %2618 = vmatprep.subr.bf16.mxu0 0
    %2619 = vmatpush1.bf16.msra.mxu0 %v2079
    %2620 = vmatprep.subr.bf16.mxu0 0
    %2621 = vmatpush1.bf16.msra.mxu0 %v2080
    %2622 = vmatprep.subr.bf16.mxu0 0
    %2623 = vmatpush1.bf16.msra.mxu0 %v2081
    %2624 = vmatprep.subr.bf16.mxu0 0
    %2625 = vmatpush1.bf16.msra.mxu0 %v2082
    %2626 = vmatprep.subr.bf16.mxu0 0
    %2627 = vmatpush1.bf16.msra.mxu0 %v2083
    %2628 = vmatprep.subr.bf16.mxu0 0
    %2629 = vmatpush1.bf16.msra.mxu0 %v2084
    %2630 = vmatprep.subr.bf16.mxu0 0
    %2631 = vmatpush1.bf16.msra.mxu0 %v2085
    %2632 = vmatprep.subr.bf16.mxu0 0
    %2633 = vmatpush1.bf16.msra.mxu0 %v2086
    %2634 = vmatprep.subr.bf16.mxu0 0
    %2635 = vmatpush1.bf16.msra.mxu0 %v2087
    %2636 = vmatprep.subr.bf16.mxu0 0
    %2637 = vmatpush1.bf16.msra.mxu0 %v2088
    %2638 = vmatprep.subr.bf16.mxu0 0
    %2639 = vmatpush1.bf16.msra.mxu0 %v2089
    %2640 = vmatprep.subr.bf16.mxu0 0
    %2641 = vmatpush1.bf16.msra.mxu0 %v2090
    %2642 = vmatprep.subr.bf16.mxu0 0
    %2643 = vmatpush1.bf16.msra.mxu0 %v2091
    %2644 = vmatprep.mubr.bf16.mxu0 %v495
    %2645 = vmatmul.mubr.bf16.gmra.mrb[0].mxu0 %v494
    %v2646 = vpop.f32.mrb[0].mxu0
    %v2647 = vadd.f32 %v2607, %v2646
    %v2648 = vpop.f32.mrb[0].mxu0
    %v2649 = vpop.f32.mrb[0].mxu0
    %v2650 = vpop.f32.mrb[0].mxu0
    %2651 = vdwg.mxu0
    %2652 = vmatprep.subr.bf16.mxu0 0
    %2653 = vmatpush1.bf16.msra.mxu0 %v2092
    %2654 = vmatprep.subr.bf16.mxu0 0
    %2655 = vmatpush1.bf16.msra.mxu0 %v2093
    %2656 = vmatprep.subr.bf16.mxu0 0
    %2657 = vmatpush1.bf16.msra.mxu0 %v2094
    %2658 = vmatprep.subr.bf16.mxu0 0
    %2659 = vmatpush1.bf16.msra.mxu0 %v2095
    %2660 = vmatprep.subr.bf16.mxu0 0
    %2661 = vmatpush1.bf16.msra.mxu0 %v2096
    %2662 = vmatprep.subr.bf16.mxu0 0
    %2663 = vmatpush1.bf16.msra.mxu0 %v2097
    %2664 = vmatprep.subr.bf16.mxu0 0
    %2665 = vmatpush1.bf16.msra.mxu0 %v2098
    %2666 = vmatprep.subr.bf16.mxu0 0
    %2667 = vmatpush1.bf16.msra.mxu0 %v2099
    %2668 = vmatprep.subr.bf16.mxu0 0
    %2669 = vmatpush1.bf16.msra.mxu0 %v2100
    %2670 = vmatprep.subr.bf16.mxu0 0
    %2671 = vmatpush1.bf16.msra.mxu0 %v2101
    %2672 = vmatprep.subr.bf16.mxu0 0
    %2673 = vmatpush1.bf16.msra.mxu0 %v2102
    %2674 = vmatprep.subr.bf16.mxu0 0
    %2675 = vmatpush1.bf16.msra.mxu0 %v2103
    %2676 = vmatprep.subr.bf16.mxu0 0
    %2677 = vmatpush1.bf16.msra.mxu0 %v2104
    %2678 = vmatprep.subr.bf16.mxu0 0
    %2679 = vmatpush1.bf16.msra.mxu0 %v2105
    %2680 = vmatprep.subr.bf16.mxu0 0
    %2681 = vmatpush1.bf16.msra.mxu0 %v2106
    %2682 = vmatprep.subr.bf16.mxu0 0
    %2683 = vmatpush1.bf16.msra.mxu0 %v2107
    %2684 = vmatprep.mubr.bf16.mxu0 %v497
    %2685 = vmatmul.mubr.bf16.gmra.mrb[0].mxu0 %v496
    %v2686 = vpop.f32.mrb[0].mxu0
    %v2687 = vadd.f32 %v2647, %v2686
    %v2688 = vpop.f32.mrb[0].mxu0
    %v2689 = vpop.f32.mrb[0].mxu0
    %v2690 = vpop.f32.mrb[0].mxu0
    %2691 = vdwg.mxu0
    %2692 = vmatprep.subr.bf16.mxu0 0
    %2693 = vmatpush1.bf16.msra.mxu0 %v2108
    %2694 = vmatprep.subr.bf16.mxu0 0
    %2695 = vmatpush1.bf16.msra.mxu0 %v2109
    %2696 = vmatprep.subr.bf16.mxu0 0
    %2697 = vmatpush1.bf16.msra.mxu0 %v2110
    %2698 = vmatprep.subr.bf16.mxu0 0
    %2699 = vmatpush1.bf16.msra.mxu0 %v2111
    %2700 = vmatprep.subr.bf16.mxu0 0
    %2701 = vmatpush1.bf16.msra.mxu0 %v2112
    %2702 = vmatprep.subr.bf16.mxu0 0
    %2703 = vmatpush1.bf16.msra.mxu0 %v2113
    %2704 = vmatprep.subr.bf16.mxu0 0
    %2705 = vmatpush1.bf16.msra.mxu0 %v2114
    %2706 = vmatprep.subr.bf16.mxu0 0
    %2707 = vmatpush1.bf16.msra.mxu0 %v2115
    %2708 = vmatprep.subr.bf16.mxu0 0
    %2709 = vmatpush1.bf16.msra.mxu0 %v2116
    %2710 = vmatprep.subr.bf16.mxu0 0
    %2711 = vmatpush1.bf16.msra.mxu0 %v2117
    %2712 = vmatprep.subr.bf16.mxu0 0
    %2713 = vmatpush1.bf16.msra.mxu0 %v2118
    %2714 = vmatprep.subr.bf16.mxu0 0
    %2715 = vmatpush1.bf16.msra.mxu0 %v2119
    %2716 = vmatprep.subr.bf16.mxu0 0
    %2717 = vmatpush1.bf16.msra.mxu0 %v2120
    %2718 = vmatprep.subr.bf16.mxu0 0
    %2719 = vmatpush1.bf16.msra.mxu0 %v2121
    %2720 = vmatprep.subr.bf16.mxu0 0
    %2721 = vmatpush1.bf16.msra.mxu0 %v2122
    %2722 = vmatprep.subr.bf16.mxu0 0
    %2723 = vmatpush1.bf16.msra.mxu0 %v2123
    %2724 = vmatprep.mubr.bf16.mxu0 %v499
    %2725 = vmatmul.mubr.bf16.gmra.mrb[0].mxu0 %v498
    %v2726 = vpop.f32.mrb[0].mxu0
    %v2727 = vadd.f32 %v2687, %v2726
    %v2728 = vpop.f32.mrb[0].mxu0
    %v2729 = vpop.f32.mrb[0].mxu0
    %v2730 = vpop.f32.mrb[0].mxu0
    %2731 = vdwg.mxu0
    %2732 = vmatprep.subr.bf16.mxu0 0
    %2733 = vmatpush1.bf16.msra.mxu0 %v2124
    %2734 = vmatprep.subr.bf16.mxu0 0
    %2735 = vmatpush1.bf16.msra.mxu0 %v2125
    %2736 = vmatprep.subr.bf16.mxu0 0
    %2737 = vmatpush1.bf16.msra.mxu0 %v2126
    %2738 = vmatprep.subr.bf16.mxu0 0
    %2739 = vmatpush1.bf16.msra.mxu0 %v2127
    %2740 = vmatprep.subr.bf16.mxu0 0
    %2741 = vmatpush1.bf16.msra.mxu0 %v2128
    %2742 = vmatprep.subr.bf16.mxu0 0
    %2743 = vmatpush1.bf16.msra.mxu0 %v2129
    %2744 = vmatprep.subr.bf16.mxu0 0
    %2745 = vmatpush1.bf16.msra.mxu0 %v2130
    %2746 = vmatprep.subr.bf16.mxu0 0
    %2747 = vmatpush1.bf16.msra.mxu0 %v2131
    %2748 = vmatprep.subr.bf16.mxu0 0
    %2749 = vmatpush1.bf16.msra.mxu0 %v2132
    %2750 = vmatprep.subr.bf16.mxu0 0
    %2751 = vmatpush1.bf16.msra.mxu0 %v2133
    %2752 = vmatprep.subr.bf16.mxu0 0
    %2753 = vmatpush1.bf16.msra.mxu0 %v2134
    %2754 = vmatprep.subr.bf16.mxu0 0
    %2755 = vmatpush1.bf16.msra.mxu0 %v2135
    %2756 = vmatprep.subr.bf16.mxu0 0
    %2757 = vmatpush1.bf16.msra.mxu0 %v2136
    %2758 = vmatprep.subr.bf16.mxu0 0
    %2759 = vmatpush1.bf16.msra.mxu0 %v2137
    %2760 = vmatprep.subr.bf16.mxu0 0
    %2761 = vmatpush1.bf16.msra.mxu0 %v2138
    %2762 = vmatprep.subr.bf16.mxu0 0
    %2763 = vmatpush1.bf16.msra.mxu0 %v2139
    %2764 = vmatprep.mubr.bf16.mxu0 %v501
    %2765 = vmatmul.mubr.bf16.gmra.mrb[0].mxu0 %v500
    %v2766 = vpop.f32.mrb[0].mxu0
    %v2767 = vadd.f32 %v2727, %v2766
    %v2768 = vpop.f32.mrb[0].mxu0
    %v2769 = vpop.f32.mrb[0].mxu0
    %v2770 = vpop.f32.mrb[0].mxu0
    %2771 = vdwg.mxu0
    %2772 = vmatprep.subr.bf16.mxu0 0
    %2773 = vmatpush1.bf16.msra.mxu0 %v2140
    %2774 = vmatprep.subr.bf16.mxu0 0
    %2775 = vmatpush1.bf16.msra.mxu0 %v2141
    %2776 = vmatprep.subr.bf16.mxu0 0
    %2777 = vmatpush1.bf16.msra.mxu0 %v2142
    %2778 = vmatprep.subr.bf16.mxu0 0
    %2779 = vmatpush1.bf16.msra.mxu0 %v2143
    %2780 = vmatprep.subr.bf16.mxu0 0
    %2781 = vmatpush1.bf16.msra.mxu0 %v2144
    %2782 = vmatprep.subr.bf16.mxu0 0
    %2783 = vmatpush1.bf16.msra.mxu0 %v2145
    %2784 = vmatprep.subr.bf16.mxu0 0
    %2785 = vmatpush1.bf16.msra.mxu0 %v2146
    %2786 = vmatprep.subr.bf16.mxu0 0
    %2787 = vmatpush1.bf16.msra.mxu0 %v2147
    %2788 = vmatprep.subr.bf16.mxu0 0
    %2789 = vmatpush1.bf16.msra.mxu0 %v2148
    %2790 = vmatprep.subr.bf16.mxu0 0
    %2791 = vmatpush1.bf16.msra.mxu0 %v2149
    %2792 = vmatprep.subr.bf16.mxu0 0
    %2793 = vmatpush1.bf16.msra.mxu0 %v2150
    %2794 = vmatprep.subr.bf16.mxu0 0
    %2795 = vmatpush1.bf16.msra.mxu0 %v2151
    %2796 = vmatprep.subr.bf16.mxu0 0
    %2797 = vmatpush1.bf16.msra.mxu0 %v2152
    %2798 = vmatprep.subr.bf16.mxu0 0
    %2799 = vmatpush1.bf16.msra.mxu0 %v2153
    %2800 = vmatprep.subr.bf16.mxu0 0
    %2801 = vmatpush1.bf16.msra.mxu0 %v2154
    %2802 = vmatprep.subr.bf16.mxu0 0
    %2803 = vmatpush1.bf16.msra.mxu0 %v2155
    %2804 = vmatprep.mubr.bf16.mxu0 %v503
    %2805 = vmatmul.mubr.bf16.gmra.mrb[0].mxu0 %v502
    %v2806 = vpop.f32.mrb[0].mxu0
    %v2807 = vadd.f32 %v2767, %v2806
    %v2808 = vpop.f32.mrb[0].mxu0
    %v2809 = vpop.f32.mrb[0].mxu0
    %v2810 = vpop.f32.mrb[0].mxu0
    %2811 = vdwg.mxu0
    %2812 = vmatprep.subr.bf16.mxu0 0
    %2813 = vmatpush1.bf16.msra.mxu0 %v2156
    %2814 = vmatprep.subr.bf16.mxu0 0
    %2815 = vmatpush1.bf16.msra.mxu0 %v2157
    %2816 = vmatprep.subr.bf16.mxu0 0
    %2817 = vmatpush1.bf16.msra.mxu0 %v2158
    %2818 = vmatprep.subr.bf16.mxu0 0
    %2819 = vmatpush1.bf16.msra.mxu0 %v2159
    %2820 = vmatprep.subr.bf16.mxu0 0
    %2821 = vmatpush1.bf16.msra.mxu0 %v2160
    %2822 = vmatprep.subr.bf16.mxu0 0
    %2823 = vmatpush1.bf16.msra.mxu0 %v2161
    %2824 = vmatprep.subr.bf16.mxu0 0
    %2825 = vmatpush1.bf16.msra.mxu0 %v2162
    %2826 = vmatprep.subr.bf16.mxu0 0
    %2827 = vmatpush1.bf16.msra.mxu0 %v2163
    %2828 = vmatprep.subr.bf16.mxu0 0
    %2829 = vmatpush1.bf16.msra.mxu0 %v2164
    %2830 = vmatprep.subr.bf16.mxu0 0
    %2831 = vmatpush1.bf16.msra.mxu0 %v2165
    %2832 = vmatprep.subr.bf16.mxu0 0
    %2833 = vmatpush1.bf16.msra.mxu0 %v2166
    %2834 = vmatprep.subr.bf16.mxu0 0
    %2835 = vmatpush1.bf16.msra.mxu0 %v2167
    %2836 = vmatprep.subr.bf16.mxu0 0
    %2837 = vmatpush1.bf16.msra.mxu0 %v2168
    %2838 = vmatprep.subr.bf16.mxu0 0
    %2839 = vmatpush1.bf16.msra.mxu0 %v2169
    %2840 = vmatprep.subr.bf16.mxu0 0
    %2841 = vmatpush1.bf16.msra.mxu0 %v2170
    %2842 = vmatprep.subr.bf16.mxu0 0
    %2843 = vmatpush1.bf16.msra.mxu0 %v2171
    %2844 = vmatprep.mubr.bf16.mxu0 %v505
    %2845 = vmatmul.mubr.bf16.gmra.mrb[0].mxu0 %v504
    %v2846 = vpop.f32.mrb[0].mxu0
    %v2847 = vadd.f32 %v2807, %v2846
    %v2848 = vpop.f32.mrb[0].mxu0
    %v2849 = vpop.f32.mrb[0].mxu0
    %v2850 = vpop.f32.mrb[0].mxu0
    %2851 = vdwg.mxu0
    %2852 = vmatprep.subr.bf16.mxu0 0
    %2853 = vmatpush1.bf16.msra.mxu0 %v2172
    %2854 = vmatprep.subr.bf16.mxu0 0
    %2855 = vmatpush1.bf16.msra.mxu0 %v2173
    %2856 = vmatprep.subr.bf16.mxu0 0
    %2857 = vmatpush1.bf16.msra.mxu0 %v2174
    %2858 = vmatprep.subr.bf16.mxu0 0
    %2859 = vmatpush1.bf16.msra.mxu0 %v2175
    %2860 = vmatprep.subr.bf16.mxu0 0
    %2861 = vmatpush1.bf16.msra.mxu0 %v2176
    %2862 = vmatprep.subr.bf16.mxu0 0
    %2863 = vmatpush1.bf16.msra.mxu0 %v2177
    %2864 = vmatprep.subr.bf16.mxu0 0
    %2865 = vmatpush1.bf16.msra.mxu0 %v2178
    %2866 = vmatprep.subr.bf16.mxu0 0
    %2867 = vmatpush1.bf16.msra.mxu0 %v2179
    %2868 = vmatprep.subr.bf16.mxu0 0
    %2869 = vmatpush1.bf16.msra.mxu0 %v2180
    %2870 = vmatprep.subr.bf16.mxu0 0
    %2871 = vmatpush1.bf16.msra.mxu0 %v2181
    %2872 = vmatprep.subr.bf16.mxu0 0
    %2873 = vmatpush1.bf16.msra.mxu0 %v2182
    %2874 = vmatprep.subr.bf16.mxu0 0
    %2875 = vmatpush1.bf16.msra.mxu0 %v2183
    %2876 = vmatprep.subr.bf16.mxu0 0
    %2877 = vmatpush1.bf16.msra.mxu0 %v2184
    %2878 = vmatprep.subr.bf16.mxu0 0
    %2879 = vmatpush1.bf16.msra.mxu0 %v2185
    %2880 = vmatprep.subr.bf16.mxu0 0
    %2881 = vmatpush1.bf16.msra.mxu0 %v2186
    %2882 = vmatprep.subr.bf16.mxu0 0
    %2883 = vmatpush1.bf16.msra.mxu0 %v2187
    %2884 = vmatprep.mubr.bf16.mxu0 %v507
    %2885 = vmatmul.mubr.bf16.gmra.mrb[0].mxu0 %v506
    %v2886 = vpop.f32.mrb[0].mxu0
    %v2887 = vadd.f32 %v2847, %v2886
    %v2888 = vpop.f32.mrb[0].mxu0
    %v2889 = vpop.f32.mrb[0].mxu0
    %v2890 = vpop.f32.mrb[0].mxu0
    %2891 = vdwg.mxu0
    %2892 = vmatprep.subr.bf16.mxu0 0
    %2893 = vmatpush1.bf16.msra.mxu0 %v2188
    %2894 = vmatprep.subr.bf16.mxu0 0
    %2895 = vmatpush1.bf16.msra.mxu0 %v2189
    %2896 = vmatprep.subr.bf16.mxu0 0
    %2897 = vmatpush1.bf16.msra.mxu0 %v2190
    %2898 = vmatprep.subr.bf16.mxu0 0
    %2899 = vmatpush1.bf16.msra.mxu0 %v2191
    %2900 = vmatprep.subr.bf16.mxu0 0
    %2901 = vmatpush1.bf16.msra.mxu0 %v2192
    %2902 = vmatprep.subr.bf16.mxu0 0
    %2903 = vmatpush1.bf16.msra.mxu0 %v2193
    %2904 = vmatprep.subr.bf16.mxu0 0
    %2905 = vmatpush1.bf16.msra.mxu0 %v2194
    %2906 = vmatprep.subr.bf16.mxu0 0
    %2907 = vmatpush1.bf16.msra.mxu0 %v2195
    %2908 = vmatprep.subr.bf16.mxu0 0
    %2909 = vmatpush1.bf16.msra.mxu0 %v2196
    %2910 = vmatprep.subr.bf16.mxu0 0
    %2911 = vmatpush1.bf16.msra.mxu0 %v2197
    %2912 = vmatprep.subr.bf16.mxu0 0
    %2913 = vmatpush1.bf16.msra.mxu0 %v2198
    %2914 = vmatprep.subr.bf16.mxu0 0
    %2915 = vmatpush1.bf16.msra.mxu0 %v2199
    %2916 = vmatprep.subr.bf16.mxu0 0
    %2917 = vmatpush1.bf16.msra.mxu0 %v2200
    %2918 = vmatprep.subr.bf16.mxu0 0
    %2919 = vmatpush1.bf16.msra.mxu0 %v2201
    %2920 = vmatprep.subr.bf16.mxu0 0
    %2921 = vmatpush1.bf16.msra.mxu0 %v2202
    %2922 = vmatprep.subr.bf16.mxu0 0
    %2923 = vmatpush1.bf16.msra.mxu0 %v2203
    %2924 = vmatprep.mubr.bf16.mxu0 %v509
    %2925 = vmatmul.mubr.bf16.gmra.mrb[0].mxu0 %v508
    %v2926 = vpop.f32.mrb[0].mxu0
    %v2927 = vadd.f32 %v2887, %v2926
    %v2928 = vpop.f32.mrb[0].mxu0
    %v2929 = vpop.f32.mrb[0].mxu0
    %v2930 = vpop.f32.mrb[0].mxu0
    %2931 = vdwg.mxu0
    %2932 = vmatprep.subr.bf16.mxu0 0
    %2933 = vmatpush1.bf16.msra.mxu0 %v2204
    %2934 = vmatprep.subr.bf16.mxu0 0
    %2935 = vmatpush1.bf16.msra.mxu0 %v2205
    %2936 = vmatprep.subr.bf16.mxu0 0
    %2937 = vmatpush1.bf16.msra.mxu0 %v2206
    %2938 = vmatprep.subr.bf16.mxu0 0
    %2939 = vmatpush1.bf16.msra.mxu0 %v2207
    %2940 = vmatprep.subr.bf16.mxu0 0
    %2941 = vmatpush1.bf16.msra.mxu0 %v2208
    %2942 = vmatprep.subr.bf16.mxu0 0
    %2943 = vmatpush1.bf16.msra.mxu0 %v2209
    %2944 = vmatprep.subr.bf16.mxu0 0
    %2945 = vmatpush1.bf16.msra.mxu0 %v2210
    %2946 = vmatprep.subr.bf16.mxu0 0
    %2947 = vmatpush1.bf16.msra.mxu0 %v2211
    %2948 = vmatprep.subr.bf16.mxu0 0
    %2949 = vmatpush1.bf16.msra.mxu0 %v2212
    %2950 = vmatprep.subr.bf16.mxu0 0
    %2951 = vmatpush1.bf16.msra.mxu0 %v2213
    %2952 = vmatprep.subr.bf16.mxu0 0
    %2953 = vmatpush1.bf16.msra.mxu0 %v2214
    %2954 = vmatprep.subr.bf16.mxu0 0
    %2955 = vmatpush1.bf16.msra.mxu0 %v2215
    %2956 = vmatprep.subr.bf16.mxu0 0
    %2957 = vmatpush1.bf16.msra.mxu0 %v2216
    %2958 = vmatprep.subr.bf16.mxu0 0
    %2959 = vmatpush1.bf16.msra.mxu0 %v2217
    %2960 = vmatprep.subr.bf16.mxu0 0
    %2961 = vmatpush1.bf16.msra.mxu0 %v2218
    %2962 = vmatprep.subr.bf16.mxu0 0
    %2963 = vmatpush1.bf16.msra.mxu0 %v2219
    %2964 = vmatprep.mubr.bf16.mxu0 %v511
    %2965 = vmatmul.mubr.bf16.gmra.mrb[0].mxu0 %v510
    %v2966 = vpop.f32.mrb[0].mxu0
    %v2967 = vadd.f32 %v2927, %v2966
    %v2968 = vpop.f32.mrb[0].mxu0
    %v2969 = vpop.f32.mrb[0].mxu0
    %v2970 = vpop.f32.mrb[0].mxu0
    %2971 = vdwg.mxu0
    %2972 = vmatprep.subr.bf16.mxu0 0
    %2973 = vmatpush1.bf16.msra.mxu0 %v2220
    %2974 = vmatprep.subr.bf16.mxu0 0
    %2975 = vmatpush1.bf16.msra.mxu0 %v2221
    %2976 = vmatprep.subr.bf16.mxu0 0
    %2977 = vmatpush1.bf16.msra.mxu0 %v2222
    %2978 = vmatprep.subr.bf16.mxu0 0
    %2979 = vmatpush1.bf16.msra.mxu0 %v2223
    %2980 = vmatprep.subr.bf16.mxu0 0
    %2981 = vmatpush1.bf16.msra.mxu0 %v2224
    %2982 = vmatprep.subr.bf16.mxu0 0
    %2983 = vmatpush1.bf16.msra.mxu0 %v2225
    %2984 = vmatprep.subr.bf16.mxu0 0
    %2985 = vmatpush1.bf16.msra.mxu0 %v2226
    %2986 = vmatprep.subr.bf16.mxu0 0
    %2987 = vmatpush1.bf16.msra.mxu0 %v2227
    %2988 = vmatprep.subr.bf16.mxu0 0
    %2989 = vmatpush1.bf16.msra.mxu0 %v2228
    %2990 = vmatprep.subr.bf16.mxu0 0
    %2991 = vmatpush1.bf16.msra.mxu0 %v2229
    %2992 = vmatprep.subr.bf16.mxu0 0
    %2993 = vmatpush1.bf16.msra.mxu0 %v2230
    %2994 = vmatprep.subr.bf16.mxu0 0
    %2995 = vmatpush1.bf16.msra.mxu0 %v2231
    %2996 = vmatprep.subr.bf16.mxu0 0
    %2997 = vmatpush1.bf16.msra.mxu0 %v2232
    %2998 = vmatprep.subr.bf16.mxu0 0
    %2999 = vmatpush1.bf16.msra.mxu0 %v2233
    %3000 = vmatprep.subr.bf16.mxu0 0
    %3001 = vmatpush1.bf16.msra.mxu0 %v2234
    %3002 = vmatprep.subr.bf16.mxu0 0
    %3003 = vmatpush1.bf16.msra.mxu0 %v2235
    %3004 = vmatprep.mubr.bf16.mxu0 %v513
    %3005 = vmatmul.mubr.bf16.gmra.mrb[0].mxu0 %v512
    %v3006 = vpop.f32.mrb[0].mxu0
    %v3007 = vadd.f32 %v2967, %v3006
    %v3008 = vpop.f32.mrb[0].mxu0
    %v3009 = vpop.f32.mrb[0].mxu0
    %v3010 = vpop.f32.mrb[0].mxu0
    %3011 = vdwg.mxu0
    %3012 = vmatprep.subr.bf16.mxu0 0
    %3013 = vmatpush1.bf16.msra.mxu0 %v2236
    %3014 = vmatprep.subr.bf16.mxu0 0
    %3015 = vmatpush1.bf16.msra.mxu0 %v2237
    %3016 = vmatprep.subr.bf16.mxu0 0
    %3017 = vmatpush1.bf16.msra.mxu0 %v2238
    %3018 = vmatprep.subr.bf16.mxu0 0
    %3019 = vmatpush1.bf16.msra.mxu0 %v2239
    %3020 = vmatprep.subr.bf16.mxu0 0
    %3021 = vmatpush1.bf16.msra.mxu0 %v2240
    %3022 = vmatprep.subr.bf16.mxu0 0
    %3023 = vmatpush1.bf16.msra.mxu0 %v2241
    %3024 = vmatprep.subr.bf16.mxu0 0
    %3025 = vmatpush1.bf16.msra.mxu0 %v2242
    %3026 = vmatprep.subr.bf16.mxu0 0
    %3027 = vmatpush1.bf16.msra.mxu0 %v2243
    %3028 = vmatprep.subr.bf16.mxu0 0
    %3029 = vmatpush1.bf16.msra.mxu0 %v2244
    %3030 = vmatprep.subr.bf16.mxu0 0
    %3031 = vmatpush1.bf16.msra.mxu0 %v2245
    %3032 = vmatprep.subr.bf16.mxu0 0
    %3033 = vmatpush1.bf16.msra.mxu0 %v2246
    %3034 = vmatprep.subr.bf16.mxu0 0
    %3035 = vmatpush1.bf16.msra.mxu0 %v2247
    %3036 = vmatprep.subr.bf16.mxu0 0
    %3037 = vmatpush1.bf16.msra.mxu0 %v2248
    %3038 = vmatprep.subr.bf16.mxu0 0
    %3039 = vmatpush1.bf16.msra.mxu0 %v2249
    %3040 = vmatprep.subr.bf16.mxu0 0
    %3041 = vmatpush1.bf16.msra.mxu0 %v2250
    %3042 = vmatprep.subr.bf16.mxu0 0
    %3043 = vmatpush1.bf16.msra.mxu0 %v2251
    %3044 = vmatprep.mubr.bf16.mxu0 %v515
    %3045 = vmatmul.mubr.bf16.gmra.mrb[0].mxu0 %v514
    %v3046 = vpop.f32.mrb[0].mxu0
    %v3047 = vadd.f32 %v3007, %v3046
    %v3048 = vpop.f32.mrb[0].mxu0
    %v3049 = vpop.f32.mrb[0].mxu0
    %v3050 = vpop.f32.mrb[0].mxu0
    %3051 = vdwg.mxu0
    %3052 = vmatprep.subr.bf16.mxu0 0
    %3053 = vmatpush1.bf16.msra.mxu0 %v2252
    %3054 = vmatprep.subr.bf16.mxu0 0
    %3055 = vmatpush1.bf16.msra.mxu0 %v2253
    %3056 = vmatprep.subr.bf16.mxu0 0
    %3057 = vmatpush1.bf16.msra.mxu0 %v2254
    %3058 = vmatprep.subr.bf16.mxu0 0
    %3059 = vmatpush1.bf16.msra.mxu0 %v2255
    %3060 = vmatprep.subr.bf16.mxu0 0
    %3061 = vmatpush1.bf16.msra.mxu0 %v2256
    %3062 = vmatprep.subr.bf16.mxu0 0
    %3063 = vmatpush1.bf16.msra.mxu0 %v2257
    %3064 = vmatprep.subr.bf16.mxu0 0
    %3065 = vmatpush1.bf16.msra.mxu0 %v2258
    %3066 = vmatprep.subr.bf16.mxu0 0
    %3067 = vmatpush1.bf16.msra.mxu0 %v2259
    %3068 = vmatprep.subr.bf16.mxu0 0
    %3069 = vmatpush1.bf16.msra.mxu0 %v2260
    %3070 = vmatprep.subr.bf16.mxu0 0
    %3071 = vmatpush1.bf16.msra.mxu0 %v2261
    %3072 = vmatprep.subr.bf16.mxu0 0
    %3073 = vmatpush1.bf16.msra.mxu0 %v2262
    %3074 = vmatprep.subr.bf16.mxu0 0
    %3075 = vmatpush1.bf16.msra.mxu0 %v2263
    %3076 = vmatprep.subr.bf16.mxu0 0
    %3077 = vmatpush1.bf16.msra.mxu0 %v2264
    %3078 = vmatprep.subr.bf16.mxu0 0
    %3079 = vmatpush1.bf16.msra.mxu0 %v2265
    %3080 = vmatprep.subr.bf16.mxu0 0
    %3081 = vmatpush1.bf16.msra.mxu0 %v2266
    %3082 = vmatprep.subr.bf16.mxu0 0
    %3083 = vmatpush1.bf16.msra.mxu0 %v2267
    %3084 = vmatprep.mubr.bf16.mxu0 %v517
    %3085 = vmatmul.mubr.bf16.gmra.mrb[0].mxu0 %v516
    %v3086 = vpop.f32.mrb[0].mxu0
    %v3087 = vadd.f32 %v3047, %v3086
    %v3088 = vpop.f32.mrb[0].mxu0
    %v3089 = vpop.f32.mrb[0].mxu0
    %v3090 = vpop.f32.mrb[0].mxu0
    %3091 = vdwg.mxu0
    %3092 = vmatprep.subr.bf16.mxu0 0
    %3093 = vmatpush1.bf16.msra.mxu0 %v2268
    %3094 = vmatprep.subr.bf16.mxu0 0
    %3095 = vmatpush1.bf16.msra.mxu0 %v2269
    %3096 = vmatprep.subr.bf16.mxu0 0
    %3097 = vmatpush1.bf16.msra.mxu0 %v2270
    %3098 = vmatprep.subr.bf16.mxu0 0
    %3099 = vmatpush1.bf16.msra.mxu0 %v2271
    %3100 = vmatprep.subr.bf16.mxu0 0
    %3101 = vmatpush1.bf16.msra.mxu0 %v2272
    %3102 = vmatprep.subr.bf16.mxu0 0
    %3103 = vmatpush1.bf16.msra.mxu0 %v2273
    %3104 = vmatprep.subr.bf16.mxu0 0
    %3105 = vmatpush1.bf16.msra.mxu0 %v2274
    %3106 = vmatprep.subr.bf16.mxu0 0
    %3107 = vmatpush1.bf16.msra.mxu0 %v2275
    %3108 = vmatprep.subr.bf16.mxu0 0
    %3109 = vmatpush1.bf16.msra.mxu0 %v2276
    %3110 = vmatprep.subr.bf16.mxu0 0
    %3111 = vmatpush1.bf16.msra.mxu0 %v2277
    %3112 = vmatprep.subr.bf16.mxu0 0
    %3113 = vmatpush1.bf16.msra.mxu0 %v2278
    %3114 = vmatprep.subr.bf16.mxu0 0
    %3115 = vmatpush1.bf16.msra.mxu0 %v2279
    %3116 = vmatprep.subr.bf16.mxu0 0
    %3117 = vmatpush1.bf16.msra.mxu0 %v2280
    %3118 = vmatprep.subr.bf16.mxu0 0
    %3119 = vmatpush1.bf16.msra.mxu0 %v2281
    %3120 = vmatprep.subr.bf16.mxu0 0
    %3121 = vmatpush1.bf16.msra.mxu0 %v2282
    %3122 = vmatprep.subr.bf16.mxu0 0
    %3123 = vmatpush1.bf16.msra.mxu0 %v2283
    %3124 = vmatprep.mubr.bf16.mxu0 %v519
    %3125 = vmatmul.mubr.bf16.gmra.mrb[0].mxu0 %v518
    %v3126 = vpop.f32.mrb[0].mxu0
    %v3127 = vadd.f32 %v3087, %v3126
    %v3128 = vpop.f32.mrb[0].mxu0
    %v3129 = vpop.f32.mrb[0].mxu0
    %v3130 = vpop.f32.mrb[0].mxu0
    %3131 = vdwg.mxu0
    %3132 = vmatprep.subr.bf16.mxu0 0
    %3133 = vmatpush1.bf16.msra.mxu0 %v2284
    %3134 = vmatprep.subr.bf16.mxu0 0
    %3135 = vmatpush1.bf16.msra.mxu0 %v2285
    %3136 = vmatprep.subr.bf16.mxu0 0
    %3137 = vmatpush1.bf16.msra.mxu0 %v2286
    %3138 = vmatprep.subr.bf16.mxu0 0
    %3139 = vmatpush1.bf16.msra.mxu0 %v2287
    %3140 = vmatprep.subr.bf16.mxu0 0
    %3141 = vmatpush1.bf16.msra.mxu0 %v2288
    %3142 = vmatprep.subr.bf16.mxu0 0
    %3143 = vmatpush1.bf16.msra.mxu0 %v2289
    %3144 = vmatprep.subr.bf16.mxu0 0
    %3145 = vmatpush1.bf16.msra.mxu0 %v2290
    %3146 = vmatprep.subr.bf16.mxu0 0
    %3147 = vmatpush1.bf16.msra.mxu0 %v2291
    %3148 = vmatprep.subr.bf16.mxu0 0
    %3149 = vmatpush1.bf16.msra.mxu0 %v2292
    %3150 = vmatprep.subr.bf16.mxu0 0
    %3151 = vmatpush1.bf16.msra.mxu0 %v2293
    %3152 = vmatprep.subr.bf16.mxu0 0
    %3153 = vmatpush1.bf16.msra.mxu0 %v2294
    %3154 = vmatprep.subr.bf16.mxu0 0
    %3155 = vmatpush1.bf16.msra.mxu0 %v2295
    %3156 = vmatprep.subr.bf16.mxu0 0
    %3157 = vmatpush1.bf16.msra.mxu0 %v2296
    %3158 = vmatprep.subr.bf16.mxu0 0
    %3159 = vmatpush1.bf16.msra.mxu0 %v2297
    %3160 = vmatprep.subr.bf16.mxu0 0
    %3161 = vmatpush1.bf16.msra.mxu0 %v2298
    %3162 = vmatprep.subr.bf16.mxu0 0
    %3163 = vmatpush1.bf16.msra.mxu0 %v2299
    %3164 = vmatprep.mubr.bf16.mxu0 %v521
    %3165 = vmatmul.mubr.bf16.gmra.mrb[0].mxu0 %v520
    %v3166 = vpop.f32.mrb[0].mxu0
    %v3167 = vadd.f32 %v3127, %v3166
    %v3168 = vpop.f32.mrb[0].mxu0
    %v3169 = vpop.f32.mrb[0].mxu0
    %v3170 = vpop.f32.mrb[0].mxu0
    %3171 = vdwg.mxu0
    %3172 = vmatprep.subr.bf16.mxu0 0
    %3173 = vmatpush1.bf16.msra.mxu0 %v2300
    %3174 = vmatprep.subr.bf16.mxu0 0
    %3175 = vmatpush1.bf16.msra.mxu0 %v2301
    %3176 = vmatprep.subr.bf16.mxu0 0
    %3177 = vmatpush1.bf16.msra.mxu0 %v2302
    %3178 = vmatprep.subr.bf16.mxu0 0
    %3179 = vmatpush1.bf16.msra.mxu0 %v2303
    %3180 = vmatprep.subr.bf16.mxu0 0
    %3181 = vmatpush1.bf16.msra.mxu0 %v2304
    %3182 = vmatprep.subr.bf16.mxu0 0
    %3183 = vmatpush1.bf16.msra.mxu0 %v2305
    %3184 = vmatprep.subr.bf16.mxu0 0
    %3185 = vmatpush1.bf16.msra.mxu0 %v2306
    %3186 = vmatprep.subr.bf16.mxu0 0
    %3187 = vmatpush1.bf16.msra.mxu0 %v2307
    %3188 = vmatprep.subr.bf16.mxu0 0
    %3189 = vmatpush1.bf16.msra.mxu0 %v2308
    %3190 = vmatprep.subr.bf16.mxu0 0
    %3191 = vmatpush1.bf16.msra.mxu0 %v2309
    %3192 = vmatprep.subr.bf16.mxu0 0
    %3193 = vmatpush1.bf16.msra.mxu0 %v2310
    %3194 = vmatprep.subr.bf16.mxu0 0
    %3195 = vmatpush1.bf16.msra.mxu0 %v2311
    %3196 = vmatprep.subr.bf16.mxu0 0
    %3197 = vmatpush1.bf16.msra.mxu0 %v2312
    %3198 = vmatprep.subr.bf16.mxu0 0
    %3199 = vmatpush1.bf16.msra.mxu0 %v2313
    %3200 = vmatprep.subr.bf16.mxu0 0
    %3201 = vmatpush1.bf16.msra.mxu0 %v2314
    %3202 = vmatprep.subr.bf16.mxu0 0
    %3203 = vmatpush1.bf16.msra.mxu0 %v2315
    %3204 = vmatprep.mubr.bf16.mxu0 %v523
    %3205 = vmatmul.mubr.bf16.gmra.mrb[0].mxu0 %v522
    %v3206 = vpop.f32.mrb[0].mxu0
    %v3207 = vadd.f32 %v3167, %v3206
    %v3208 = vpop.f32.mrb[0].mxu0
    %v3209 = vpop.f32.mrb[0].mxu0
    %v3210 = vpop.f32.mrb[0].mxu0
    %3211 = vdwg.mxu0
    %v3212 = vmul.f32 %v3207, 20.0
    %3213 = vst [vmem:[#allocation7] sm:$0x3] %v3212
    // Predicated region
    $region18: #{predictor_forward.1} parent=1 // pred_check
      _
    $region19: #{predictor_forward.1} parent=1 // pred_check_branch
      %3215 = sbr.rel (0) target = $region21
    $region20: #{predictor_forward.1} parent=1 // pred_region
      %s3217 = ssub.s32 32, 32
      %3218 = vsyncadd [#allocation4], %s3217
      %s3220 = sshll.u32 [#allocation7], 4
      %s3221 = int_to_ptr.vmem [resolvable:$true] %s3220
      %3223 = dma.vmem_to_hbm [thread:$0]  %s3221, 32, %s2, [#allocation4]
    $region21: #{predictor_forward.1} parent=1 // pred_fallthru
      _
    // Predicated region
    $region22: #{predictor_forward.1} parent=1 // pred_check
      _
    $region23: #{predictor_forward.1} parent=1 // pred_check_branch
      %3225 = sbr.rel (0) target = $region25
    $region24: #{predictor_forward.1} parent=1 // pred_region
      %3226 = dma.done [#allocation4], 32
    $region25: #{predictor_forward.1} parent=1 // pred_fallthru
      _
    %3227 = vsyncpa [#allocation3], 1
    %3228 = vsyncpa [#allocation6], 1
    %3229 = vsyncpa [#allocation4], 1

</llo_original>
